<compile_context>
chip_gen: v7x
topology: tpu7x:2x2x1
jax: 0.10.0
libtpu: 0.0.40
codegen_flags: <defaults>
</compile_context>

<pallas_src>
import jax
import jax.numpy as jnp
from jax import lax
from jax.experimental import pallas as pl
from jax.experimental.pallas import tpu as pltpu


_TILE_VMEM_BUDGET = 24 * 1024 * 1024   # double-buffered tile working-set budget


def _pick_anchor_tile(a: int, rows: int) -> int:
    """Largest anchor tile (multiple of 128 dividing A) whose double-buffered
    working set of `rows` f32 rows of width TA fits the VMEM budget."""
    for ta in (65536, 32768, 16384, 8192, 4096, 2048, 1024, 512, 256, 128):
        if a % ta == 0 and 8 * rows * ta <= _TILE_VMEM_BUDGET:
            return ta
    # A not 128-divisible (or tiny): a single tile covering all anchors is a
    # legal block (block dim == full array dim).
    return a


# ----------------------------------------------------------------------------
# Kernel 1: IoU(gt, priors) fused with matching reductions.
#   outputs: best_truth_overlap (B,1,A), best_truth_idx (B,1,A),
#            best_prior_idx (B,O,1) -- never materializes (B,A,O) in HBM.
# ----------------------------------------------------------------------------
def _iou_match_kernel(gt_ref, pr_ref, bto_ref, bti_ref, bpi_ref,
                      vmax_scr, vidx_scr):
    t = pl.program_id(1)
    num_t = pl.num_programs(1)
    num_obj = gt_ref.shape[0]
    tile_a = pr_ref.shape[1]

    gx1 = gt_ref[:, 0:1]; gy1 = gt_ref[:, 1:2]          # (O, 1)
    gx2 = gt_ref[:, 2:3]; gy2 = gt_ref[:, 3:4]
    px1 = pr_ref[0:1, :]; py1 = pr_ref[1:2, :]          # (1, TA)
    px2 = pr_ref[2:3, :]; py2 = pr_ref[3:4, :]

    iw = jnp.maximum(jnp.minimum(px2, gx2) - jnp.maximum(px1, gx1), 0.0)
    ih = jnp.maximum(jnp.minimum(py2, gy2) - jnp.maximum(py1, gy1), 0.0)
    inter = iw * ih                                     # (O, TA)
    area_g = (gx2 - gx1) * (gy2 - gy1)                  # (O, 1)
    area_p = (px2 - px1) * (py2 - py1)                  # (1, TA)
    # exact divide for match/threshold parity (no approx reciprocal)
    iou = inter / (area_g + area_p - inter + 1e-12)

    # best ground-truth per anchor (sublane / object reduction), int32 indices
    btv = jnp.max(iou, axis=0, keepdims=True)                               # (1, TA)
    obj_iota = lax.broadcasted_iota(jnp.int32, iou.shape, 0)
    bti = jnp.min(jnp.where(iou == btv, obj_iota, num_obj),
                  axis=0, keepdims=True)                                    # (1, TA)
    bto_ref[...] = btv
    bti_ref[...] = bti

    # best anchor per ground-truth (lane reduction), running max over tiles;
    # the tile offset is added to the reduced (O,1) index, not the full iota.
    tmax = jnp.max(iou, axis=1, keepdims=True)                              # (O, 1)
    anc_iota = lax.broadcasted_iota(jnp.int32, iou.shape, 1)
    tidx = (jnp.min(jnp.where(iou == tmax, anc_iota, tile_a),
                    axis=1, keepdims=True) + t * tile_a)                    # (O, 1)

    @pl.when(t == 0)
    def _():
        vmax_scr[...] = tmax
        vidx_scr[...] = tidx

    @pl.when(t > 0)
    def _():
        upd = tmax > vmax_scr[...]
        vidx_scr[...] = jnp.where(upd, tidx, vidx_scr[...])
        vmax_scr[...] = jnp.maximum(tmax, vmax_scr[...])

    @pl.when(t == num_t - 1)
    def _():
        bpi_ref[...] = vidx_scr[...]


# ----------------------------------------------------------------------------
# Kernel 2: per-anchor cross-entropies, packed output (3, TA):
#   row 0: mined CE (CE vs assigned label, zeroed on positives)
#   row 1: CE vs assigned label   row 2: CE vs background (class 0)
# Two-class closed form (softplus of the logit difference) when C == 2.
# ----------------------------------------------------------------------------
def _mining_kernel(conf_ref, lab_ref, out_ref):
    conf = conf_ref[...]                                 # (C, TA)
    lab = lab_ref[...]                                   # (1, TA) int32
    if conf.shape[0] == 2:
        d = conf[1:2, :] - conf[0:1, :]
        log_term = jnp.log(1.0 + jnp.exp(-jnp.abs(d)))   # stable softplus tail
        ce_bg = jnp.maximum(d, 0.0) + log_term           # softplus(c1 - c0)
        ce_fg = jnp.maximum(-d, 0.0) + log_term          # softplus(c0 - c1)
        ce_lab = jnp.where(lab > 0, ce_fg, ce_bg)
    else:
        m = jnp.max(conf, axis=0, keepdims=True)         # (1, TA)
        lse = jnp.log(jnp.sum(jnp.exp(conf - m), axis=0, keepdims=True)) + m
        cls_iota = lax.broadcasted_iota(jnp.int32, conf.shape, 0)
        onehot = (cls_iota == lab).astype(conf.dtype)
        ce_lab = lse - jnp.sum(conf * onehot, axis=0, keepdims=True)
        ce_bg = lse - conf[0:1, :]
    out_ref[0:1, :] = jnp.where(lab > 0, 0.0, ce_lab)
    out_ref[1:2, :] = ce_lab
    out_ref[2:3, :] = ce_bg


# ----------------------------------------------------------------------------
# Kernel 3: masked confidence + smooth-L1 reductions, accumulated over anchor
# tiles into per-batch scalars. Matched-gt targets gathered in-kernel from
# gt_pack (B, 8, O) = [clean cx,cy,log w,log h ; validity 0/1] via a one-hot
# over O (MXU matmul for larger O, sublane select for tiny O).
# ----------------------------------------------------------------------------
def _loss_kernel(ce_ref, idx_ref, neg_ref, pbox_ref, gtp_ref, pf_ref,
                 ce_out, npos_out, loc_out, cnt_out):
    t = pl.program_id(1)

    lab = idx_ref[0:1, :]                                # (1, TA) int32
    bti = idx_ref[1:2, :]                                # (1, TA) int32
    pos = lab > 0
    pos_f = pos.astype(jnp.float32)
    neg = neg_ref[...]                                   # (1, TA)

    ce_part = jnp.sum(pos_f * ce_ref[1:2, :] + neg * ce_ref[2:3, :],
                      axis=1, keepdims=True)             # (1, 1)
    npos_part = jnp.sum(pos_f, axis=1, keepdims=True)

    # --- gather matched-gt features + validity ---
    num_obj = gtp_ref.shape[1]
    lanes = bti.shape[1]
    if num_obj >= 32:
        obj_iota = lax.broadcasted_iota(jnp.int32, (num_obj, lanes), 0)
        onehot = (obj_iota == bti).astype(jnp.float32)   # (O, TA)
        gathered = jnp.dot(gtp_ref[...], onehot,         # MXU (otherwise idle)
                           preferred_element_type=jnp.float32,
                           precision=lax.Precision.HIGHEST)   # (8, TA)
    else:
        gathered = jnp.zeros((8, lanes), jnp.float32)
        for o in range(num_obj):                          # tiny O: VPU selects
            gathered = jnp.where(bti == o, gtp_ref[:, o:o + 1], gathered)

    gt = gathered[0:4, :]                                # cx, cy, log w, log h
    gval = gathered[4:8, :]                              # per-coord validity

    pf = pf_ref[...]                                     # (8, TA)
    # encode: rows 0-3 = prior feats, rows 4-7 = scales (1/(v0 pw), 1/(v0 ph), 1/v1, 1/v1)
    g_enc = (gt - pf[0:4, :]) * pf[4:8, :]               # (4, TA)
    diff = g_enc - pbox_ref[...]
    absd = jnp.abs(diff)
    sl1 = jnp.where(absd < 1.0, 0.5 * diff * diff, absd - 0.5)
    valid = jnp.logical_and(pos, gval > 0.5)             # (4, TA)
    loc_part = jnp.sum(jnp.sum(jnp.where(valid, sl1, 0.0),
                               axis=1, keepdims=True), axis=0, keepdims=True)
    cnt_part = jnp.sum(jnp.sum(valid.astype(jnp.float32),
                               axis=1, keepdims=True), axis=0, keepdims=True)

    @pl.when(t == 0)
    def _():
        ce_out[...] = jnp.zeros_like(ce_out)
        npos_out[...] = jnp.zeros_like(npos_out)
        loc_out[...] = jnp.zeros_like(loc_out)
        cnt_out[...] = jnp.zeros_like(cnt_out)

    ce_out[...] += ce_part
    npos_out[...] += npos_part
    loc_out[...] += loc_part
    cnt_out[...] += cnt_part


# ----------------------------------------------------------------------------
# Wrapper: MultiBoxLoss.forward
# ----------------------------------------------------------------------------
def multibox_loss(pred_classes, pred_boxes, true_classes, true_boxes, priors,
                  overlap_thresh=0.35, negpos_ratio=7, variances=(0.1, 0.2)):
    f32 = jnp.float32
    B, A, C = pred_classes.shape
    O = true_boxes.shape[1]
    v0, v1 = variances

    # tile sized from the fattest kernel's VMEM footprint (K3: 18 rows of TA)
    rows_max = max(6, C + 4, 18)
    TA = _pick_anchor_tile(A, rows_max)
    T = A // TA
    ws_bytes = 2 * rows_max * TA * 4          # double-buffered working set
    vmem_limit = int(min(100 << 20, max(8 << 20, ws_bytes * 2)))

    pred_classes = pred_classes.astype(f32)
    pred_boxes = pred_boxes.astype(f32)
    true_boxes = true_boxes.astype(f32)
    labels = true_classes.reshape(B, O).astype(jnp.int32)
    priors = priors.astype(f32)

    pcx, pcy, pw, ph = priors[:, 0], priors[:, 1], priors[:, 2], priors[:, 3]
    priors_corner_t = jnp.stack(
        [pcx - pw * 0.5, pcy - ph * 0.5, pcx + pw * 0.5, pcy + ph * 0.5],
        axis=0)                                          # (4, A) lane-dense

    par_arb = pltpu.CompilerParams(
        dimension_semantics=("parallel", "arbitrary"), vmem_limit_bytes=vmem_limit)
    par_par = pltpu.CompilerParams(
        dimension_semantics=("parallel", "parallel"), vmem_limit_bytes=vmem_limit)

    # ---- kernel 1: IoU + fused best-gt / best-anchor reductions ----
    bto, bti, bpi = pl.pallas_call(
        _iou_match_kernel,
        out_shape=(jax.ShapeDtypeStruct((B, 1, A), f32),
                   jax.ShapeDtypeStruct((B, 1, A), jnp.int32),
                   jax.ShapeDtypeStruct((B, O, 1), jnp.int32)),
        grid=(B, T),
        in_specs=[pl.BlockSpec((None, O, 4), lambda b, t: (b, 0, 0)),
                  pl.BlockSpec((4, TA), lambda b, t: (0, t))],
        out_specs=(pl.BlockSpec((None, 1, TA), lambda b, t: (b, 0, t)),
                   pl.BlockSpec((None, 1, TA), lambda b, t: (b, 0, t)),
                   pl.BlockSpec((None, O, 1), lambda b, t: (b, 0, 0))),
        scratch_shapes=[pltpu.VMEM((O, 1), f32), pltpu.VMEM((O, 1), jnp.int32)],
        compiler_params=par_arb,
    )(true_boxes, priors_corner_t)

    bto = bto.reshape(B, A)
    bti = bti.reshape(B, A)
    bpi = bpi.reshape(B, O)

    # ---- matching glue (O(B*(A+O)) elementwise / tiny scatters) ----
    b_idx = jnp.arange(B)[:, None]
    obj_ids = jnp.broadcast_to(jnp.arange(O, dtype=jnp.int32)[None, :], (B, O))
    # force-match: deterministic last-gt-wins (scatter-max on the gt index),
    # matching the torch in-order loop when one anchor is best for several gts.
    force_j = jnp.full((B, A), -1, jnp.int32).at[b_idx, bpi].max(obj_ids)
    forced = force_j >= 0
    bti = jnp.where(forced, force_j, bti)
    bto = jnp.where(forced, 2.0, bto)
    gathered_label = jnp.take_along_axis(labels, bti, axis=1)
    # positives = matched label > 0 after thresholding (consistent with the
    # confidence-loss normalizer n_pos = (targets > 0).sum()).
    anchor_label = jnp.where(bto >= overlap_thresh, gathered_label, 0
                             ).astype(jnp.int32)                       # (B, A)
    pos = anchor_label > 0

    # ---- kernel 2: per-anchor cross-entropies (packed (B,3,A) output) ----
    conf_t = jnp.transpose(pred_classes, (0, 2, 1))      # (B, C, A) lane-dense
    ce_pack = pl.pallas_call(
        _mining_kernel,
        out_shape=jax.ShapeDtypeStruct((B, 3, A), f32),
        grid=(B, T),
        in_specs=[pl.BlockSpec((None, C, TA), lambda b, t: (b, 0, t)),
                  pl.BlockSpec((None, 1, TA), lambda b, t: (b, 0, t))],
        out_specs=pl.BlockSpec((None, 3, TA), lambda b, t: (b, 0, t)),
        compiler_params=par_par,
    )(conf_t, anchor_label.reshape(B, 1, A))

    # ---- hard-negative mining: exact-count top-num_neg selection
    #      (values sort + cumsum; no argsort payload, no rank scatter) ----
    mine = ce_pack[:, 0, :]                              # (B, A)
    num_pos = jnp.sum(pos, axis=1)                       # (B,)
    num_neg = jnp.minimum(negpos_ratio * num_pos, A - 1)
    sorted_desc = -jnp.sort(-mine, axis=1)
    kth_idx = jnp.clip(num_neg - 1, 0, A - 1)
    thresh = jnp.take_along_axis(sorted_desc, kth_idx[:, None], axis=1)   # (B,1)
    greater = mine > thresh
    n_greater = jnp.sum(greater.astype(jnp.int32), axis=1, keepdims=True)
    eq = mine == thresh
    eq_rank = jnp.cumsum(eq.astype(jnp.int32), axis=1)
    neg = greater | (eq & (eq_rank <= (num_neg[:, None] - n_greater)))
    neg_f = neg.astype(f32)

    # ---- localization encode precursors (all logs / divides hoisted here:
    #      O(B*O + A) transcendentals instead of O(B*A) inside the kernel) ----
    gx1, gy1 = true_boxes[:, :, 0], true_boxes[:, :, 1]
    gx2, gy2 = true_boxes[:, :, 2], true_boxes[:, :, 3]
    gt_feat = jnp.stack([(gx1 + gx2) * 0.5, (gy1 + gy2) * 0.5,
                         jnp.log(gx2 - gx1), jnp.log(gy2 - gy1)], axis=1)  # (B,4,O)
    gt_valid = jnp.isfinite(gt_feat)                     # masks NaN / log(<=0)
    gt_pack = jnp.concatenate(
        [jnp.where(gt_valid, gt_feat, 0.0), gt_valid.astype(f32)], axis=1)  # (B,8,O)
    inv_v1 = 1.0 / v1
    prior_feat = jnp.stack([pcx, pcy, jnp.log(pw), jnp.log(ph),
                            1.0 / (v0 * pw), 1.0 / (v0 * ph),
                            jnp.full_like(pw, inv_v1),
                            jnp.full_like(ph, inv_v1)], axis=0)             # (8, A)
    pbox_t = jnp.transpose(pred_boxes, (0, 2, 1))        # (B, 4, A)
    idx_pack = jnp.stack([anchor_label, bti], axis=1)    # (B, 2, A) int32

    # ---- kernel 3: masked confidence + smooth-L1 reductions ----
    ce_s, npos_s, loc_s, cnt_s = pl.pallas_call(
        _loss_kernel,
        out_shape=tuple(jax.ShapeDtypeStruct((B, 1, 1), f32) for _ in range(4)),
        grid=(B, T),
        in_specs=[pl.BlockSpec((None, 3, TA), lambda b, t: (b, 0, t)),   # ce_pack
                  pl.BlockSpec((None, 2, TA), lambda b, t: (b, 0, t)),   # idx_pack
                  pl.BlockSpec((None, 1, TA), lambda b, t: (b, 0, t)),   # neg
                  pl.BlockSpec((None, 4, TA), lambda b, t: (b, 0, t)),   # pred boxes
                  pl.BlockSpec((None, 8, O), lambda b, t: (b, 0, 0)),    # gt feats
                  pl.BlockSpec((8, TA), lambda b, t: (0, t))],           # prior feats
        out_specs=tuple(pl.BlockSpec((None, 1, 1), lambda b, t: (b, 0, 0))
                        for _ in range(4)),
        compiler_params=par_arb,
    )(ce_pack, idx_pack, neg_f.reshape(B, 1, A), pbox_t, gt_pack, prior_feat)

    ce_sum = jnp.sum(ce_s)
    n_pos_total = jnp.sum(npos_s)
    loc_sum = jnp.sum(loc_s)
    loc_cnt = jnp.sum(cnt_s)

    # WeightedLoss weights: classes=2, boxes=1
    loss_classes = 2.0 * ce_sum / n_pos_total
    loss_boxes = 1.0 * loc_sum / jnp.maximum(loc_cnt, 1.0)
    return {"classes": loss_classes,
            "boxes": loss_boxes,
            "loss": loss_classes + loss_boxes}


if __name__ == "__main__":
    B, A, O, C = 2, 128, 8, 2
    key = jax.random.PRNGKey(0)
    k1, k2, k3, k4, k5, k6 = jax.random.split(key, 6)

    # priors (anchors) in center-size form
    prior_cxy = jax.random.uniform(k1, (A, 2), minval=0.1, maxval=0.9)
    prior_wh = jax.random.uniform(k2, (A, 2), minval=0.05, maxval=0.3)
    priors = jnp.concatenate([prior_cxy, prior_wh], axis=1)

    # ground-truth boxes in corner form, labels all "face" (=1)
    gt_cxy = jax.random.uniform(k3, (B, O, 2), minval=0.2, maxval=0.8)
    gt_wh = jax.random.uniform(k4, (B, O, 2), minval=0.05, maxval=0.3)
    gt_boxes = jnp.concatenate([gt_cxy - gt_wh / 2, gt_cxy + gt_wh / 2], axis=2)
    gt_labels = jnp.ones((B, O, 1), dtype=jnp.int32)

    # predictions
    pred_classes = jax.random.normal(k5, (B, A, C), dtype=jnp.float32)
    pred_boxes = jax.random.normal(k6, (B, A, 4), dtype=jnp.float32) * 0.5

    losses = jax.jit(multibox_loss)(pred_classes, pred_boxes, gt_labels,
                                    gt_boxes, priors)
    jax.block_until_ready(losses)
    print("KERNEL_OK")
</pallas_src>

<mosaic_0001>
module attributes {stable_mosaic.version = 11 : i64} {
  func.func private @main(%arg0: i32) attributes {dimension_semantics = [#tpu.dimension_semantics<core_parallel>], iteration_bounds = array<i64: 2>, tpu.core_type = #tpu.core_type<sc_scalar_subcore>, window_params = []} {
    return
  }
}

module attributes {stable_mosaic.version = 11 : i64} {
  func.func private @main(%arg0: i32) attributes {dimension_semantics = [#tpu.dimension_semantics<core_parallel>], iteration_bounds = array<i64: 2>, tpu.core_type = #tpu.core_type<sc_scalar_subcore>, window_params = []} {
    return
  }
}

module attributes {stable_mosaic.version = 11 : i64} {
  func.func @_iou_match_kernel(%arg0: i32, %arg1: i32, %arg2: memref<1x8x4xf32, #tpu.memory_space<vmem>>, %arg3: memref<4x128xf32, #tpu.memory_space<vmem>>, %arg4: memref<1x1x128xf32, #tpu.memory_space<vmem>>, %arg5: memref<1x1x128xi32, #tpu.memory_space<vmem>>, %arg6: memref<1x8x1xi32, #tpu.memory_space<vmem>>, %arg7: memref<8x1xf32, #tpu.memory_space<vmem>>, %arg8: memref<8x1xi32, #tpu.memory_space<vmem>>) attributes {dimension_semantics = [#tpu.dimension_semantics<parallel>, #tpu.dimension_semantics<arbitrary>], iteration_bounds = array<i64: 2, 1>, scalar_prefetch = 0 : i64, scratch_operands = 2 : i64, tpu.core_type = #tpu.core_type<tc>, window_params = [{transform_indices = @transform_0, window_bounds = array<i64: 1, 8, 4>}, {transform_indices = @transform_1, window_bounds = array<i64: 4, 128>}, {transform_indices = @transform_2, window_bounds = array<i64: 1, 1, 128>}, {transform_indices = @transform_3, window_bounds = array<i64: 1, 1, 128>}, {transform_indices = @transform_4, window_bounds = array<i64: 1, 8, 1>}]} {
    %c0 = arith.constant 0 : index
    %c0_0 = arith.constant 0 : index
    %c0_1 = arith.constant 0 : index
    %0 = vector.load %arg2[%c0, %c0_0, %c0_1] : memref<1x8x4xf32, #tpu.memory_space<vmem>>, vector<1x8x1xf32>
    %1 = vector.shape_cast %0 : vector<1x8x1xf32> to vector<8x1xf32>
    %c0_2 = arith.constant 0 : index
    %c0_3 = arith.constant 0 : index
    %c1 = arith.constant 1 : index
    %2 = vector.load %arg2[%c0_2, %c0_3, %c1] : memref<1x8x4xf32, #tpu.memory_space<vmem>>, vector<1x8x1xf32>
    %3 = vector.shape_cast %2 : vector<1x8x1xf32> to vector<8x1xf32>
    %c0_4 = arith.constant 0 : index
    %c0_5 = arith.constant 0 : index
    %c2 = arith.constant 2 : index
    %4 = vector.load %arg2[%c0_4, %c0_5, %c2] : memref<1x8x4xf32, #tpu.memory_space<vmem>>, vector<1x8x1xf32>
    %5 = vector.shape_cast %4 : vector<1x8x1xf32> to vector<8x1xf32>
    %c0_6 = arith.constant 0 : index
    %c0_7 = arith.constant 0 : index
    %c3 = arith.constant 3 : index
    %6 = vector.load %arg2[%c0_6, %c0_7, %c3] : memref<1x8x4xf32, #tpu.memory_space<vmem>>, vector<1x8x1xf32>
    %7 = vector.shape_cast %6 : vector<1x8x1xf32> to vector<8x1xf32>
    %c0_8 = arith.constant 0 : index
    %c0_9 = arith.constant 0 : index
    %8 = vector.load %arg3[%c0_8, %c0_9] : memref<4x128xf32, #tpu.memory_space<vmem>>, vector<1x128xf32>
    %c1_10 = arith.constant 1 : index
    %c0_11 = arith.constant 0 : index
    %9 = vector.load %arg3[%c1_10, %c0_11] : memref<4x128xf32, #tpu.memory_space<vmem>>, vector<1x128xf32>
    %c2_12 = arith.constant 2 : index
    %c0_13 = arith.constant 0 : index
    %10 = vector.load %arg3[%c2_12, %c0_13] : memref<4x128xf32, #tpu.memory_space<vmem>>, vector<1x128xf32>
    %c3_14 = arith.constant 3 : index
    %c0_15 = arith.constant 0 : index
    %11 = vector.load %arg3[%c3_14, %c0_15] : memref<4x128xf32, #tpu.memory_space<vmem>>, vector<1x128xf32>
    %12 = vector.broadcast %10 : vector<1x128xf32> to vector<8x128xf32>
    %13 = vector.broadcast %5 : vector<8x1xf32> to vector<8x128xf32>
    %14 = arith.minimumf %12, %13 : vector<8x128xf32>
    %15 = vector.broadcast %8 : vector<1x128xf32> to vector<8x128xf32>
    %16 = vector.broadcast %1 : vector<8x1xf32> to vector<8x128xf32>
    %17 = arith.maximumf %15, %16 : vector<8x128xf32>
    %18 = arith.subf %14, %17 : vector<8x128xf32>
    %cst = arith.constant 0.000000e+00 : f32
    %19 = vector.broadcast %cst : f32 to vector<8x128xf32>
    %20 = arith.maximumf %18, %19 : vector<8x128xf32>
    %21 = vector.broadcast %11 : vector<1x128xf32> to vector<8x128xf32>
    %22 = vector.broadcast %7 : vector<8x1xf32> to vector<8x128xf32>
    %23 = arith.minimumf %21, %22 : vector<8x128xf32>
    %24 = vector.broadcast %9 : vector<1x128xf32> to vector<8x128xf32>
    %25 = vector.broadcast %3 : vector<8x1xf32> to vector<8x128xf32>
    %26 = arith.maximumf %24, %25 : vector<8x128xf32>
    %27 = arith.subf %23, %26 : vector<8x128xf32>
    %cst_16 = arith.constant 0.000000e+00 : f32
    %28 = vector.broadcast %cst_16 : f32 to vector<8x128xf32>
    %29 = arith.maximumf %27, %28 : vector<8x128xf32>
    %30 = arith.mulf %20, %29 : vector<8x128xf32>
    %31 = arith.subf %5, %1 : vector<8x1xf32>
    %32 = arith.subf %7, %3 : vector<8x1xf32>
    %33 = arith.mulf %31, %32 : vector<8x1xf32>
    %34 = arith.subf %10, %8 : vector<1x128xf32>
    %35 = arith.subf %11, %9 : vector<1x128xf32>
    %36 = arith.mulf %34, %35 : vector<1x128xf32>
    %37 = vector.broadcast %33 : vector<8x1xf32> to vector<8x128xf32>
    %38 = vector.broadcast %36 : vector<1x128xf32> to vector<8x128xf32>
    %39 = arith.addf %37, %38 : vector<8x128xf32>
    %40 = arith.subf %39, %30 : vector<8x128xf32>
    %cst_17 = arith.constant 9.99999996E-13 : f32
    %41 = vector.broadcast %cst_17 : f32 to vector<8x128xf32>
    %42 = arith.addf %40, %41 : vector<8x128xf32>
    %43 = arith.divf %30, %42 : vector<8x128xf32>
    %cst_18 = arith.constant dense<0xFF800000> : vector<128xf32>
    %44 = vector.multi_reduction <maximumf>, %43, %cst_18 [0] : vector<8x128xf32> to vector<128xf32>
    %45 = vector.shape_cast %44 : vector<128xf32> to vector<1x128xf32>
    %46 = tpu.iota {dimensions = array<i32: 0>} : vector<8x128xi32>
    %47 = vector.broadcast %45 : vector<1x128xf32> to vector<8x128xf32>
    %48 = arith.cmpf oeq, %43, %47 : vector<8x128xf32>
    %c8_i32 = arith.constant 8 : i32
    %49 = vector.broadcast %c8_i32 : i32 to vector<8x128xi32>
    %50 = arith.select %48, %46, %49 : vector<8x128xi1>, vector<8x128xi32>
    %cst_19 = arith.constant dense<2147483647> : vector<128xi32>
    %51 = vector.multi_reduction <minsi>, %50, %cst_19 [0] : vector<8x128xi32> to vector<128xi32>
    %52 = vector.shape_cast %51 : vector<128xi32> to vector<1x128xi32>
    %c0_20 = arith.constant 0 : index
    %c0_21 = arith.constant 0 : index
    %c0_22 = arith.constant 0 : index
    %53 = vector.load %arg4[%c0_20, %c0_21, %c0_22] : memref<1x1x128xf32, #tpu.memory_space<vmem>>, vector<1x1x128xf32>
    %54 = vector.shape_cast %53 : vector<1x1x128xf32> to vector<1x128xf32>
    %55 = vector.shape_cast %45 : vector<1x128xf32> to vector<1x1x128xf32>
    tpu.vector_store %arg4[%c0_20, %c0_21, %c0_22], %55 {strides = array<i32>} : memref<1x1x128xf32, #tpu.memory_space<vmem>>, vector<1x1x128xf32>,
    %c0_23 = arith.constant 0 : index
    %c0_24 = arith.constant 0 : index
    %c0_25 = arith.constant 0 : index
    %56 = vector.load %arg5[%c0_23, %c0_24, %c0_25] : memref<1x1x128xi32, #tpu.memory_space<vmem>>, vector<1x1x128xi32>
    %57 = vector.shape_cast %56 : vector<1x1x128xi32> to vector<1x128xi32>
    %58 = vector.shape_cast %52 : vector<1x128xi32> to vector<1x1x128xi32>
    tpu.vector_store %arg5[%c0_23, %c0_24, %c0_25], %58 {strides = array<i32>} : memref<1x1x128xi32, #tpu.memory_space<vmem>>, vector<1x1x128xi32>,
    %cst_26 = arith.constant dense<0xFF800000> : vector<8xf32>
    %59 = vector.multi_reduction <maximumf>, %43, %cst_26 [1] : vector<8x128xf32> to vector<8xf32>
    %60 = vector.shape_cast %59 : vector<8xf32> to vector<8x1xf32>
    %61 = tpu.iota {dimensions = array<i32: 1>} : vector<8x128xi32>
    %62 = vector.broadcast %60 : vector<8x1xf32> to vector<8x128xf32>
    %63 = arith.cmpf oeq, %43, %62 : vector<8x128xf32>
    %c128_i32 = arith.constant 128 : i32
    %64 = vector.broadcast %c128_i32 : i32 to vector<8x128xi32>
    %65 = arith.select %63, %61, %64 : vector<8x128xi1>, vector<8x128xi32>
    %cst_27 = arith.constant dense<2147483647> : vector<8xi32>
    %66 = vector.multi_reduction <minsi>, %65, %cst_27 [1] : vector<8x128xi32> to vector<8xi32>
    %67 = vector.shape_cast %66 : vector<8xi32> to vector<8x1xi32>
    %c128_i32_28 = arith.constant 128 : i32
    %68 = arith.muli %arg1, %c128_i32_28 : i32
    %69 = vector.broadcast %68 : i32 to vector<8x1xi32>
    %70 = arith.addi %67, %69 : vector<8x1xi32>
    %c0_i32 = arith.constant 0 : i32
    %71 = arith.cmpi eq, %arg1, %c0_i32 : i32
    %72 = arith.extui %71 : i1 to i32
    %c0_i32_29 = arith.constant 0 : i32
    %73 = arith.cmpi ne, %72, %c0_i32_29 : i32
    scf.if %73 {
      %c0_34 = arith.constant 0 : index
      %c0_35 = arith.constant 0 : index
      %80 = vector.load %arg7[%c0_34, %c0_35] : memref<8x1xf32, #tpu.memory_space<vmem>>, vector<8x1xf32>
      tpu.vector_store %arg7[%c0_34, %c0_35], %60 {strides = array<i32>} : memref<8x1xf32, #tpu.memory_space<vmem>>, vector<8x1xf32>,
      %c0_36 = arith.constant 0 : index
      %c0_37 = arith.constant 0 : index
      %81 = vector.load %arg8[%c0_36, %c0_37] : memref<8x1xi32, #tpu.memory_space<vmem>>, vector<8x1xi32>
      tpu.vector_store %arg8[%c0_36, %c0_37], %70 {strides = array<i32>} : memref<8x1xi32, #tpu.memory_space<vmem>>, vector<8x1xi32>,
    } else {
    }
    %c0_i32_30 = arith.constant 0 : i32
    %74 = arith.cmpi sgt, %arg1, %c0_i32_30 : i32
    %75 = arith.extui %74 : i1 to i32
    %c0_i32_31 = arith.constant 0 : i32
    %76 = arith.cmpi ne, %75, %c0_i32_31 : i32
    scf.if %76 {
      %c0_34 = arith.constant 0 : index
      %c0_35 = arith.constant 0 : index
      %80 = vector.load %arg7[%c0_34, %c0_35] : memref<8x1xf32, #tpu.memory_space<vmem>>, vector<8x1xf32>
      %81 = arith.cmpf ogt, %60, %80 : vector<8x1xf32>
      %c0_36 = arith.constant 0 : index
      %c0_37 = arith.constant 0 : index
      %82 = vector.load %arg8[%c0_36, %c0_37] : memref<8x1xi32, #tpu.memory_space<vmem>>, vector<8x1xi32>
      %83 = arith.select %81, %70, %82 : vector<8x1xi1>, vector<8x1xi32>
      %c0_38 = arith.constant 0 : index
      %c0_39 = arith.constant 0 : index
      %84 = vector.load %arg8[%c0_38, %c0_39] : memref<8x1xi32, #tpu.memory_space<vmem>>, vector<8x1xi32>
      tpu.vector_store %arg8[%c0_38, %c0_39], %83 {strides = array<i32>} : memref<8x1xi32, #tpu.memory_space<vmem>>, vector<8x1xi32>,
      %c0_40 = arith.constant 0 : index
      %c0_41 = arith.constant 0 : index
      %85 = vector.load %arg7[%c0_40, %c0_41] : memref<8x1xf32, #tpu.memory_space<vmem>>, vector<8x1xf32>
      %86 = arith.maximumf %60, %85 : vector<8x1xf32>
      %c0_42 = arith.constant 0 : index
      %c0_43 = arith.constant 0 : index
      %87 = vector.load %arg7[%c0_42, %c0_43] : memref<8x1xf32, #tpu.memory_space<vmem>>, vector<8x1xf32>
      tpu.vector_store %arg7[%c0_42, %c0_43], %86 {strides = array<i32>} : memref<8x1xf32, #tpu.memory_space<vmem>>, vector<8x1xf32>,
    } else {
    }
    %c0_i32_32 = arith.constant 0 : i32
    %77 = arith.cmpi eq, %arg1, %c0_i32_32 : i32
    %78 = arith.extui %77 : i1 to i32
    %c0_i32_33 = arith.constant 0 : i32
    %79 = arith.cmpi ne, %78, %c0_i32_33 : i32
    scf.if %79 {
      %c0_34 = arith.constant 0 : index
      %c0_35 = arith.constant 0 : index
      %80 = vector.load %arg8[%c0_34, %c0_35] : memref<8x1xi32, #tpu.memory_space<vmem>>, vector<8x1xi32>
      %c0_36 = arith.constant 0 : index
      %c0_37 = arith.constant 0 : index
      %c0_38 = arith.constant 0 : index
      %81 = vector.load %arg6[%c0_36, %c0_37, %c0_38] : memref<1x8x1xi32, #tpu.memory_space<vmem>>, vector<1x8x1xi32>
      %82 = vector.shape_cast %81 : vector<1x8x1xi32> to vector<8x1xi32>
      %83 = vector.shape_cast %80 : vector<8x1xi32> to vector<1x8x1xi32>
      tpu.vector_store %arg6[%c0_36, %c0_37, %c0_38], %83 {strides = array<i32>} : memref<1x8x1xi32, #tpu.memory_space<vmem>>, vector<1x8x1xi32>,
    } else {
    }
    return
  }
  func.func @transform_0(%arg0: i32, %arg1: i32) -> (i32, i32, i32) {
    %c0_i32 = arith.constant 0 : i32
    %c0_i32_0 = arith.constant 0 : i32
    %c0_i32_1 = arith.constant 0 : i32
    return %arg0, %c0_i32, %c0_i32_0 : i32, i32, i32
  }
  func.func @transform_1(%arg0: i32, %arg1: i32) -> (i32, i32) {
    %c0_i32 = arith.constant 0 : i32
    %c0_i32_0 = arith.constant 0 : i32
    return %c0_i32, %arg1 : i32, i32
  }
  func.func @transform_2(%arg0: i32, %arg1: i32) -> (i32, i32, i32) {
    %c0_i32 = arith.constant 0 : i32
    %c0_i32_0 = arith.constant 0 : i32
    return %arg0, %c0_i32, %arg1 : i32, i32, i32
  }
  func.func @transform_3(%arg0: i32, %arg1: i32) -> (i32, i32, i32) {
    %c0_i32 = arith.constant 0 : i32
    %c0_i32_0 = arith.constant 0 : i32
    return %arg0, %c0_i32, %arg1 : i32, i32, i32
  }
  func.func @transform_4(%arg0: i32, %arg1: i32) -> (i32, i32, i32) {
    %c0_i32 = arith.constant 0 : i32
    %c0_i32_0 = arith.constant 0 : i32
    %c0_i32_1 = arith.constant 0 : i32
    return %arg0, %c0_i32, %c0_i32_0 : i32, i32, i32
  }
}

module attributes {stable_mosaic.version = 11 : i64} {
  func.func @_mining_kernel(%arg0: i32, %arg1: i32, %arg2: memref<1x2x128xf32, #tpu.memory_space<vmem>>, %arg3: memref<1x1x128xi32, #tpu.memory_space<vmem>>, %arg4: memref<1x3x128xf32, #tpu.memory_space<vmem>>) attributes {dimension_semantics = [#tpu.dimension_semantics<parallel>, #tpu.dimension_semantics<parallel>], iteration_bounds = array<i64: 2, 1>, scalar_prefetch = 0 : i64, scratch_operands = 0 : i64, tpu.core_type = #tpu.core_type<tc>, window_params = [{transform_indices = @transform_0, window_bounds = array<i64: 1, 2, 128>}, {transform_indices = @transform_1, window_bounds = array<i64: 1, 1, 128>}, {transform_indices = @transform_2, window_bounds = array<i64: 1, 3, 128>}]} {
    %c0 = arith.constant 0 : index
    %c0_0 = arith.constant 0 : index
    %c0_1 = arith.constant 0 : index
    %0 = vector.load %arg2[%c0, %c0_0, %c0_1] : memref<1x2x128xf32, #tpu.memory_space<vmem>>, vector<1x2x128xf32>
    %1 = vector.shape_cast %0 : vector<1x2x128xf32> to vector<2x128xf32>
    %c0_2 = arith.constant 0 : index
    %c0_3 = arith.constant 0 : index
    %c0_4 = arith.constant 0 : index
    %2 = vector.load %arg3[%c0_2, %c0_3, %c0_4] : memref<1x1x128xi32, #tpu.memory_space<vmem>>, vector<1x1x128xi32>
    %3 = vector.shape_cast %2 : vector<1x1x128xi32> to vector<1x128xi32>
    %4 = vector.extract_strided_slice %1 {offsets = [1, 0], sizes = [1, 128], strides = [1, 1]} : vector<2x128xf32> to vector<1x128xf32>
    %5 = vector.extract_strided_slice %1 {offsets = [0, 0], sizes = [1, 128], strides = [1, 1]} : vector<2x128xf32> to vector<1x128xf32>
    %6 = arith.subf %4, %5 : vector<1x128xf32>
    %7 = math.absf %6 : vector<1x128xf32>
    %cst = arith.constant 0.000000e+00 : f32
    %8 = vector.broadcast %cst : f32 to vector<1x128xf32>
    %9 = arith.subf %8, %7 : vector<1x128xf32>
    %10 = math.exp %9 : vector<1x128xf32>
    %cst_5 = arith.constant 1.000000e+00 : f32
    %11 = vector.broadcast %cst_5 : f32 to vector<1x128xf32>
    %12 = arith.addf %11, %10 : vector<1x128xf32>
    %13 = math.log %12 : vector<1x128xf32>
    %cst_6 = arith.constant 0.000000e+00 : f32
    %14 = vector.broadcast %cst_6 : f32 to vector<1x128xf32>
    %15 = arith.maximumf %6, %14 : vector<1x128xf32>
    %16 = arith.addf %15, %13 : vector<1x128xf32>
    %cst_7 = arith.constant 0.000000e+00 : f32
    %17 = vector.broadcast %cst_7 : f32 to vector<1x128xf32>
    %18 = arith.subf %17, %6 : vector<1x128xf32>
    %cst_8 = arith.constant 0.000000e+00 : f32
    %19 = vector.broadcast %cst_8 : f32 to vector<1x128xf32>
    %20 = arith.maximumf %18, %19 : vector<1x128xf32>
    %21 = arith.addf %20, %13 : vector<1x128xf32>
    %c0_i32 = arith.constant 0 : i32
    %22 = vector.broadcast %c0_i32 : i32 to vector<1x128xi32>
    %23 = arith.cmpi sgt, %3, %22 : vector<1x128xi32>
    %24 = arith.select %23, %21, %16 : vector<1x128xi1>, vector<1x128xf32>
    %c0_i32_9 = arith.constant 0 : i32
    %25 = vector.broadcast %c0_i32_9 : i32 to vector<1x128xi32>
    %26 = arith.cmpi sgt, %3, %25 : vector<1x128xi32>
    %cst_10 = arith.constant 0.000000e+00 : f32
    %27 = vector.broadcast %cst_10 : f32 to vector<1x128xf32>
    %28 = arith.select %26, %27, %24 : vector<1x128xi1>, vector<1x128xf32>
    %c0_11 = arith.constant 0 : index
    %c0_12 = arith.constant 0 : index
    %c0_13 = arith.constant 0 : index
    %29 = vector.load %arg4[%c0_11, %c0_12, %c0_13] : memref<1x3x128xf32, #tpu.memory_space<vmem>>, vector<1x1x128xf32>
    %30 = vector.shape_cast %29 : vector<1x1x128xf32> to vector<1x128xf32>
    %31 = vector.shape_cast %28 : vector<1x128xf32> to vector<1x1x128xf32>
    tpu.vector_store %arg4[%c0_11, %c0_12, %c0_13], %31 {strides = array<i32>} : memref<1x3x128xf32, #tpu.memory_space<vmem>>, vector<1x1x128xf32>,
    %c0_14 = arith.constant 0 : index
    %c1 = arith.constant 1 : index
    %c0_15 = arith.constant 0 : index
    %32 = vector.load %arg4[%c0_14, %c1, %c0_15] : memref<1x3x128xf32, #tpu.memory_space<vmem>>, vector<1x1x128xf32>
    %33 = vector.shape_cast %32 : vector<1x1x128xf32> to vector<1x128xf32>
    %34 = vector.shape_cast %24 : vector<1x128xf32> to vector<1x1x128xf32>
    tpu.vector_store %arg4[%c0_14, %c1, %c0_15], %34 {strides = array<i32>} : memref<1x3x128xf32, #tpu.memory_space<vmem>>, vector<1x1x128xf32>,
    %c0_16 = arith.constant 0 : index
    %c2 = arith.constant 2 : index
    %c0_17 = arith.constant 0 : index
    %35 = vector.load %arg4[%c0_16, %c2, %c0_17] : memref<1x3x128xf32, #tpu.memory_space<vmem>>, vector<1x1x128xf32>
    %36 = vector.shape_cast %35 : vector<1x1x128xf32> to vector<1x128xf32>
    %37 = vector.shape_cast %16 : vector<1x128xf32> to vector<1x1x128xf32>
    tpu.vector_store %arg4[%c0_16, %c2, %c0_17], %37 {strides = array<i32>} : memref<1x3x128xf32, #tpu.memory_space<vmem>>, vector<1x1x128xf32>,
    return
  }
  func.func @transform_0(%arg0: i32, %arg1: i32) -> (i32, i32, i32) {
    %c0_i32 = arith.constant 0 : i32
    %c0_i32_0 = arith.constant 0 : i32
    return %arg0, %c0_i32, %arg1 : i32, i32, i32
  }
  func.func @transform_1(%arg0: i32, %arg1: i32) -> (i32, i32, i32) {
    %c0_i32 = arith.constant 0 : i32
    %c0_i32_0 = arith.constant 0 : i32
    return %arg0, %c0_i32, %arg1 : i32, i32, i32
  }
  func.func @transform_2(%arg0: i32, %arg1: i32) -> (i32, i32, i32) {
    %c0_i32 = arith.constant 0 : i32
    %c0_i32_0 = arith.constant 0 : i32
    return %arg0, %c0_i32, %arg1 : i32, i32, i32
  }
}

module attributes {stable_mosaic.version = 11 : i64} {
  func.func @_loss_kernel(%arg0: i32, %arg1: i32, %arg2: memref<1x3x128xf32, #tpu.memory_space<vmem>>, %arg3: memref<1x2x128xi32, #tpu.memory_space<vmem>>, %arg4: memref<1x1x128xf32, #tpu.memory_space<vmem>>, %arg5: memref<1x4x128xf32, #tpu.memory_space<vmem>>, %arg6: memref<1x8x8xf32, #tpu.memory_space<vmem>>, %arg7: memref<8x128xf32, #tpu.memory_space<vmem>>, %arg8: memref<1x1x1xf32, #tpu.memory_space<vmem>>, %arg9: memref<1x1x1xf32, #tpu.memory_space<vmem>>, %arg10: memref<1x1x1xf32, #tpu.memory_space<vmem>>, %arg11: memref<1x1x1xf32, #tpu.memory_space<vmem>>) attributes {dimension_semantics = [#tpu.dimension_semantics<parallel>, #tpu.dimension_semantics<arbitrary>], iteration_bounds = array<i64: 2, 1>, scalar_prefetch = 0 : i64, scratch_operands = 0 : i64, tpu.core_type = #tpu.core_type<tc>, window_params = [{transform_indices = @transform_0, window_bounds = array<i64: 1, 3, 128>}, {transform_indices = @transform_1, window_bounds = array<i64: 1, 2, 128>}, {transform_indices = @transform_2, window_bounds = array<i64: 1, 1, 128>}, {transform_indices = @transform_3, window_bounds = array<i64: 1, 4, 128>}, {transform_indices = @transform_4, window_bounds = array<i64: 1, 8, 8>}, {transform_indices = @transform_5, window_bounds = array<i64: 8, 128>}, {transform_indices = @transform_6, window_bounds = array<i64: 1, 1, 1>}, {transform_indices = @transform_7, window_bounds = array<i64: 1, 1, 1>}, {transform_indices = @transform_8, window_bounds = array<i64: 1, 1, 1>}, {transform_indices = @transform_9, window_bounds = array<i64: 1, 1, 1>}]} {
    %c0 = arith.constant 0 : index
    %c0_0 = arith.constant 0 : index
    %c0_1 = arith.constant 0 : index
    %0 = vector.load %arg3[%c0, %c0_0, %c0_1] : memref<1x2x128xi32, #tpu.memory_space<vmem>>, vector<1x1x128xi32>
    %1 = vector.shape_cast %0 : vector<1x1x128xi32> to vector<1x128xi32>
    %c0_2 = arith.constant 0 : index
    %c1 = arith.constant 1 : index
    %c0_3 = arith.constant 0 : index
    %2 = vector.load %arg3[%c0_2, %c1, %c0_3] : memref<1x2x128xi32, #tpu.memory_space<vmem>>, vector<1x1x128xi32>
    %3 = vector.shape_cast %2 : vector<1x1x128xi32> to vector<1x128xi32>
    %c0_i32 = arith.constant 0 : i32
    %4 = vector.broadcast %c0_i32 : i32 to vector<1x128xi32>
    %5 = arith.cmpi sgt, %1, %4 : vector<1x128xi32>
    %6 = arith.extui %5 : vector<1x128xi1> to vector<1x128xi32>
    %7 = arith.sitofp %6 : vector<1x128xi32> to vector<1x128xf32>
    %c0_4 = arith.constant 0 : index
    %c0_5 = arith.constant 0 : index
    %c0_6 = arith.constant 0 : index
    %8 = vector.load %arg4[%c0_4, %c0_5, %c0_6] : memref<1x1x128xf32, #tpu.memory_space<vmem>>, vector<1x1x128xf32>
    %9 = vector.shape_cast %8 : vector<1x1x128xf32> to vector<1x128xf32>
    %c0_7 = arith.constant 0 : index
    %c1_8 = arith.constant 1 : index
    %c0_9 = arith.constant 0 : index
    %10 = vector.load %arg2[%c0_7, %c1_8, %c0_9] : memref<1x3x128xf32, #tpu.memory_space<vmem>>, vector<1x1x128xf32>
    %11 = vector.shape_cast %10 : vector<1x1x128xf32> to vector<1x128xf32>
    %12 = arith.mulf %7, %11 : vector<1x128xf32>
    %c0_10 = arith.constant 0 : index
    %c2 = arith.constant 2 : index
    %c0_11 = arith.constant 0 : index
    %13 = vector.load %arg2[%c0_10, %c2, %c0_11] : memref<1x3x128xf32, #tpu.memory_space<vmem>>, vector<1x1x128xf32>
    %14 = vector.shape_cast %13 : vector<1x1x128xf32> to vector<1x128xf32>
    %15 = arith.mulf %9, %14 : vector<1x128xf32>
    %16 = arith.addf %12, %15 : vector<1x128xf32>
    %cst = arith.constant dense<0.000000e+00> : vector<1xf32>
    %17 = vector.multi_reduction <add>, %16, %cst [1] : vector<1x128xf32> to vector<1xf32>
    %18 = vector.shape_cast %17 : vector<1xf32> to vector<1x1xf32>
    %cst_12 = arith.constant dense<0.000000e+00> : vector<1xf32>
    %19 = vector.multi_reduction <add>, %7, %cst_12 [1] : vector<1x128xf32> to vector<1xf32>
    %20 = vector.shape_cast %19 : vector<1xf32> to vector<1x1xf32>
    %cst_13 = arith.constant 0.000000e+00 : f32
    %21 = vector.broadcast %cst_13 : f32 to vector<8x128xf32>
    %c0_i32_14 = arith.constant 0 : i32
    %22 = vector.broadcast %c0_i32_14 : i32 to vector<1x128xi32>
    %23 = arith.cmpi eq, %3, %22 : vector<1x128xi32>
    %c0_15 = arith.constant 0 : index
    %c0_16 = arith.constant 0 : index
    %c0_17 = arith.constant 0 : index
    %24 = vector.load %arg6[%c0_15, %c0_16, %c0_17] : memref<1x8x8xf32, #tpu.memory_space<vmem>>, vector<1x8x1xf32>
    %25 = vector.shape_cast %24 : vector<1x8x1xf32> to vector<8x1xf32>
    %26 = vector.shape_cast %23 : vector<1x128xi1> to vector<1x128xi1>
    %27 = vector.broadcast %26 : vector<1x128xi1> to vector<8x128xi1>
    %28 = vector.shape_cast %25 : vector<8x1xf32> to vector<8x1xf32>
    %29 = vector.broadcast %28 : vector<8x1xf32> to vector<8x128xf32>
    %30 = arith.select %27, %29, %21 : vector<8x128xi1>, vector<8x128xf32>
    %c1_i32 = arith.constant 1 : i32
    %31 = vector.broadcast %c1_i32 : i32 to vector<1x128xi32>
    %32 = arith.cmpi eq, %3, %31 : vector<1x128xi32>
    %c0_18 = arith.constant 0 : index
    %c0_19 = arith.constant 0 : index
    %c1_20 = arith.constant 1 : index
    %33 = vector.load %arg6[%c0_18, %c0_19, %c1_20] : memref<1x8x8xf32, #tpu.memory_space<vmem>>, vector<1x8x1xf32>
    %34 = vector.shape_cast %33 : vector<1x8x1xf32> to vector<8x1xf32>
    %35 = vector.shape_cast %32 : vector<1x128xi1> to vector<1x128xi1>
    %36 = vector.broadcast %35 : vector<1x128xi1> to vector<8x128xi1>
    %37 = vector.shape_cast %34 : vector<8x1xf32> to vector<8x1xf32>
    %38 = vector.broadcast %37 : vector<8x1xf32> to vector<8x128xf32>
    %39 = arith.select %36, %38, %30 : vector<8x128xi1>, vector<8x128xf32>
    %c2_i32 = arith.constant 2 : i32
    %40 = vector.broadcast %c2_i32 : i32 to vector<1x128xi32>
    %41 = arith.cmpi eq, %3, %40 : vector<1x128xi32>
    %c0_21 = arith.constant 0 : index
    %c0_22 = arith.constant 0 : index
    %c2_23 = arith.constant 2 : index
    %42 = vector.load %arg6[%c0_21, %c0_22, %c2_23] : memref<1x8x8xf32, #tpu.memory_space<vmem>>, vector<1x8x1xf32>
    %43 = vector.shape_cast %42 : vector<1x8x1xf32> to vector<8x1xf32>
    %44 = vector.shape_cast %41 : vector<1x128xi1> to vector<1x128xi1>
    %45 = vector.broadcast %44 : vector<1x128xi1> to vector<8x128xi1>
    %46 = vector.shape_cast %43 : vector<8x1xf32> to vector<8x1xf32>
    %47 = vector.broadcast %46 : vector<8x1xf32> to vector<8x128xf32>
    %48 = arith.select %45, %47, %39 : vector<8x128xi1>, vector<8x128xf32>
    %c3_i32 = arith.constant 3 : i32
    %49 = vector.broadcast %c3_i32 : i32 to vector<1x128xi32>
    %50 = arith.cmpi eq, %3, %49 : vector<1x128xi32>
    %c0_24 = arith.constant 0 : index
    %c0_25 = arith.constant 0 : index
    %c3 = arith.constant 3 : index
    %51 = vector.load %arg6[%c0_24, %c0_25, %c3] : memref<1x8x8xf32, #tpu.memory_space<vmem>>, vector<1x8x1xf32>
    %52 = vector.shape_cast %51 : vector<1x8x1xf32> to vector<8x1xf32>
    %53 = vector.shape_cast %50 : vector<1x128xi1> to vector<1x128xi1>
    %54 = vector.broadcast %53 : vector<1x128xi1> to vector<8x128xi1>
    %55 = vector.shape_cast %52 : vector<8x1xf32> to vector<8x1xf32>
    %56 = vector.broadcast %55 : vector<8x1xf32> to vector<8x128xf32>
    %57 = arith.select %54, %56, %48 : vector<8x128xi1>, vector<8x128xf32>
    %c4_i32 = arith.constant 4 : i32
    %58 = vector.broadcast %c4_i32 : i32 to vector<1x128xi32>
    %59 = arith.cmpi eq, %3, %58 : vector<1x128xi32>
    %c0_26 = arith.constant 0 : index
    %c0_27 = arith.constant 0 : index
    %c4 = arith.constant 4 : index
    %60 = vector.load %arg6[%c0_26, %c0_27, %c4] : memref<1x8x8xf32, #tpu.memory_space<vmem>>, vector<1x8x1xf32>
    %61 = vector.shape_cast %60 : vector<1x8x1xf32> to vector<8x1xf32>
    %62 = vector.shape_cast %59 : vector<1x128xi1> to vector<1x128xi1>
    %63 = vector.broadcast %62 : vector<1x128xi1> to vector<8x128xi1>
    %64 = vector.shape_cast %61 : vector<8x1xf32> to vector<8x1xf32>
    %65 = vector.broadcast %64 : vector<8x1xf32> to vector<8x128xf32>
    %66 = arith.select %63, %65, %57 : vector<8x128xi1>, vector<8x128xf32>
    %c5_i32 = arith.constant 5 : i32
    %67 = vector.broadcast %c5_i32 : i32 to vector<1x128xi32>
    %68 = arith.cmpi eq, %3, %67 : vector<1x128xi32>
    %c0_28 = arith.constant 0 : index
    %c0_29 = arith.constant 0 : index
    %c5 = arith.constant 5 : index
    %69 = vector.load %arg6[%c0_28, %c0_29, %c5] : memref<1x8x8xf32, #tpu.memory_space<vmem>>, vector<1x8x1xf32>
    %70 = vector.shape_cast %69 : vector<1x8x1xf32> to vector<8x1xf32>
    %71 = vector.shape_cast %68 : vector<1x128xi1> to vector<1x128xi1>
    %72 = vector.broadcast %71 : vector<1x128xi1> to vector<8x128xi1>
    %73 = vector.shape_cast %70 : vector<8x1xf32> to vector<8x1xf32>
    %74 = vector.broadcast %73 : vector<8x1xf32> to vector<8x128xf32>
    %75 = arith.select %72, %74, %66 : vector<8x128xi1>, vector<8x128xf32>
    %c6_i32 = arith.constant 6 : i32
    %76 = vector.broadcast %c6_i32 : i32 to vector<1x128xi32>
    %77 = arith.cmpi eq, %3, %76 : vector<1x128xi32>
    %c0_30 = arith.constant 0 : index
    %c0_31 = arith.constant 0 : index
    %c6 = arith.constant 6 : index
    %78 = vector.load %arg6[%c0_30, %c0_31, %c6] : memref<1x8x8xf32, #tpu.memory_space<vmem>>, vector<1x8x1xf32>
    %79 = vector.shape_cast %78 : vector<1x8x1xf32> to vector<8x1xf32>
    %80 = vector.shape_cast %77 : vector<1x128xi1> to vector<1x128xi1>
    %81 = vector.broadcast %80 : vector<1x128xi1> to vector<8x128xi1>
    %82 = vector.shape_cast %79 : vector<8x1xf32> to vector<8x1xf32>
    %83 = vector.broadcast %82 : vector<8x1xf32> to vector<8x128xf32>
    %84 = arith.select %81, %83, %75 : vector<8x128xi1>, vector<8x128xf32>
    %c7_i32 = arith.constant 7 : i32
    %85 = vector.broadcast %c7_i32 : i32 to vector<1x128xi32>
    %86 = arith.cmpi eq, %3, %85 : vector<1x128xi32>
    %c0_32 = arith.constant 0 : index
    %c0_33 = arith.constant 0 : index
    %c7 = arith.constant 7 : index
    %87 = vector.load %arg6[%c0_32, %c0_33, %c7] : memref<1x8x8xf32, #tpu.memory_space<vmem>>, vector<1x8x1xf32>
    %88 = vector.shape_cast %87 : vector<1x8x1xf32> to vector<8x1xf32>
    %89 = vector.shape_cast %86 : vector<1x128xi1> to vector<1x128xi1>
    %90 = vector.broadcast %89 : vector<1x128xi1> to vector<8x128xi1>
    %91 = vector.shape_cast %88 : vector<8x1xf32> to vector<8x1xf32>
    %92 = vector.broadcast %91 : vector<8x1xf32> to vector<8x128xf32>
    %93 = arith.select %90, %92, %84 : vector<8x128xi1>, vector<8x128xf32>
    %94 = vector.extract_strided_slice %93 {offsets = [0, 0], sizes = [4, 128], strides = [1, 1]} : vector<8x128xf32> to vector<4x128xf32>
    %95 = vector.extract_strided_slice %93 {offsets = [4, 0], sizes = [4, 128], strides = [1, 1]} : vector<8x128xf32> to vector<4x128xf32>
    %c0_34 = arith.constant 0 : index
    %c0_35 = arith.constant 0 : index
    %96 = vector.load %arg7[%c0_34, %c0_35] : memref<8x128xf32, #tpu.memory_space<vmem>>, vector<8x128xf32>
    %97 = vector.extract_strided_slice %96 {offsets = [0, 0], sizes = [4, 128], strides = [1, 1]} : vector<8x128xf32> to vector<4x128xf32>
    %98 = arith.subf %94, %97 : vector<4x128xf32>
    %99 = vector.extract_strided_slice %96 {offsets = [4, 0], sizes = [4, 128], strides = [1, 1]} : vector<8x128xf32> to vector<4x128xf32>
    %100 = arith.mulf %98, %99 : vector<4x128xf32>
    %c0_36 = arith.constant 0 : index
    %c0_37 = arith.constant 0 : index
    %c0_38 = arith.constant 0 : index
    %101 = vector.load %arg5[%c0_36, %c0_37, %c0_38] : memref<1x4x128xf32, #tpu.memory_space<vmem>>, vector<1x4x128xf32>
    %102 = vector.shape_cast %101 : vector<1x4x128xf32> to vector<4x128xf32>
    %103 = arith.subf %100, %102 : vector<4x128xf32>
    %104 = math.absf %103 : vector<4x128xf32>
    %cst_39 = arith.constant 1.000000e+00 : f32
    %105 = vector.broadcast %cst_39 : f32 to vector<4x128xf32>
    %106 = arith.cmpf olt, %104, %105 : vector<4x128xf32>
    %cst_40 = arith.constant 5.000000e-01 : f32
    %107 = vector.broadcast %cst_40 : f32 to vector<4x128xf32>
    %108 = arith.mulf %107, %103 : vector<4x128xf32>
    %109 = arith.mulf %108, %103 : vector<4x128xf32>
    %cst_41 = arith.constant 5.000000e-01 : f32
    %110 = vector.broadcast %cst_41 : f32 to vector<4x128xf32>
    %111 = arith.subf %104, %110 : vector<4x128xf32>
    %112 = arith.select %106, %109, %111 : vector<4x128xi1>, vector<4x128xf32>
    %cst_42 = arith.constant 5.000000e-01 : f32
    %113 = vector.broadcast %cst_42 : f32 to vector<4x128xf32>
    %114 = arith.cmpf ogt, %95, %113 : vector<4x128xf32>
    %115 = vector.broadcast %5 : vector<1x128xi1> to vector<4x128xi1>
    %116 = arith.andi %115, %114 : vector<4x128xi1>
    %cst_43 = arith.constant 0.000000e+00 : f32
    %117 = vector.broadcast %cst_43 : f32 to vector<4x128xf32>
    %118 = arith.select %116, %112, %117 : vector<4x128xi1>, vector<4x128xf32>
    %cst_44 = arith.constant dense<0.000000e+00> : vector<4xf32>
    %119 = vector.multi_reduction <add>, %118, %cst_44 [1] : vector<4x128xf32> to vector<4xf32>
    %120 = vector.shape_cast %119 : vector<4xf32> to vector<4x1xf32>
    %cst_45 = arith.constant dense<0.000000e+00> : vector<1xf32>
    %121 = vector.multi_reduction <add>, %120, %cst_45 [0] : vector<4x1xf32> to vector<1xf32>
    %122 = vector.shape_cast %121 : vector<1xf32> to vector<1x1xf32>
    %123 = arith.extui %116 : vector<4x128xi1> to vector<4x128xi32>
    %124 = arith.sitofp %123 : vector<4x128xi32> to vector<4x128xf32>
    %cst_46 = arith.constant dense<0.000000e+00> : vector<4xf32>
    %125 = vector.multi_reduction <add>, %124, %cst_46 [1] : vector<4x128xf32> to vector<4xf32>
    %126 = vector.shape_cast %125 : vector<4xf32> to vector<4x1xf32>
    %cst_47 = arith.constant dense<0.000000e+00> : vector<1xf32>
    %127 = vector.multi_reduction <add>, %126, %cst_47 [0] : vector<4x1xf32> to vector<1xf32>
    %128 = vector.shape_cast %127 : vector<1xf32> to vector<1x1xf32>
    %c0_i32_48 = arith.constant 0 : i32
    %129 = arith.cmpi eq, %arg1, %c0_i32_48 : i32
    %130 = arith.extui %129 : i1 to i32
    %c0_i32_49 = arith.constant 0 : i32
    %131 = arith.cmpi ne, %130, %c0_i32_49 : i32
    scf.if %131 {
      %cst_74 = arith.constant 0.000000e+00 : f32
      %156 = vector.broadcast %cst_74 : f32 to vector<1x1xf32>
      %c0_75 = arith.constant 0 : index
      %c0_76 = arith.constant 0 : index
      %c0_77 = arith.constant 0 : index
      %157 = vector.load %arg8[%c0_75, %c0_76, %c0_77] : memref<1x1x1xf32, #tpu.memory_space<vmem>>, vector<1x1x1xf32>
      %158 = vector.shape_cast %157 : vector<1x1x1xf32> to vector<1x1xf32>
      %159 = vector.shape_cast %156 : vector<1x1xf32> to vector<1x1x1xf32>
      tpu.vector_store %arg8[%c0_75, %c0_76, %c0_77], %159 {strides = array<i32>} : memref<1x1x1xf32, #tpu.memory_space<vmem>>, vector<1x1x1xf32>,
      %cst_78 = arith.constant 0.000000e+00 : f32
      %160 = vector.broadcast %cst_78 : f32 to vector<1x1xf32>
      %c0_79 = arith.constant 0 : index
      %c0_80 = arith.constant 0 : index
      %c0_81 = arith.constant 0 : index
      %161 = vector.load %arg9[%c0_79, %c0_80, %c0_81] : memref<1x1x1xf32, #tpu.memory_space<vmem>>, vector<1x1x1xf32>
      %162 = vector.shape_cast %161 : vector<1x1x1xf32> to vector<1x1xf32>
      %163 = vector.shape_cast %160 : vector<1x1xf32> to vector<1x1x1xf32>
      tpu.vector_store %arg9[%c0_79, %c0_80, %c0_81], %163 {strides = array<i32>} : memref<1x1x1xf32, #tpu.memory_space<vmem>>, vector<1x1x1xf32>,
      %cst_82 = arith.constant 0.000000e+00 : f32
      %164 = vector.broadcast %cst_82 : f32 to vector<1x1xf32>
      %c0_83 = arith.constant 0 : index
      %c0_84 = arith.constant 0 : index
      %c0_85 = arith.constant 0 : index
      %165 = vector.load %arg10[%c0_83, %c0_84, %c0_85] : memref<1x1x1xf32, #tpu.memory_space<vmem>>, vector<1x1x1xf32>
      %166 = vector.shape_cast %165 : vector<1x1x1xf32> to vector<1x1xf32>
      %167 = vector.shape_cast %164 : vector<1x1xf32> to vector<1x1x1xf32>
      tpu.vector_store %arg10[%c0_83, %c0_84, %c0_85], %167 {strides = array<i32>} : memref<1x1x1xf32, #tpu.memory_space<vmem>>, vector<1x1x1xf32>,
      %cst_86 = arith.constant 0.000000e+00 : f32
      %168 = vector.broadcast %cst_86 : f32 to vector<1x1xf32>
      %c0_87 = arith.constant 0 : index
      %c0_88 = arith.constant 0 : index
      %c0_89 = arith.constant 0 : index
      %169 = vector.load %arg11[%c0_87, %c0_88, %c0_89] : memref<1x1x1xf32, #tpu.memory_space<vmem>>, vector<1x1x1xf32>
      %170 = vector.shape_cast %169 : vector<1x1x1xf32> to vector<1x1xf32>
      %171 = vector.shape_cast %168 : vector<1x1xf32> to vector<1x1x1xf32>
      tpu.vector_store %arg11[%c0_87, %c0_88, %c0_89], %171 {strides = array<i32>} : memref<1x1x1xf32, #tpu.memory_space<vmem>>, vector<1x1x1xf32>,
    } else {
    }
    %c0_50 = arith.constant 0 : index
    %c0_51 = arith.constant 0 : index
    %c0_52 = arith.constant 0 : index
    %132 = vector.load %arg8[%c0_50, %c0_51, %c0_52] : memref<1x1x1xf32, #tpu.memory_space<vmem>>, vector<1x1x1xf32>
    %133 = vector.shape_cast %132 : vector<1x1x1xf32> to vector<1x1xf32>
    %134 = arith.addf %133, %18 : vector<1x1xf32>
    %c0_53 = arith.constant 0 : index
    %c0_54 = arith.constant 0 : index
    %c0_55 = arith.constant 0 : index
    %135 = vector.load %arg8[%c0_53, %c0_54, %c0_55] : memref<1x1x1xf32, #tpu.memory_space<vmem>>, vector<1x1x1xf32>
    %136 = vector.shape_cast %135 : vector<1x1x1xf32> to vector<1x1xf32>
    %137 = vector.shape_cast %134 : vector<1x1xf32> to vector<1x1x1xf32>
    tpu.vector_store %arg8[%c0_53, %c0_54, %c0_55], %137 {strides = array<i32>} : memref<1x1x1xf32, #tpu.memory_space<vmem>>, vector<1x1x1xf32>,
    %c0_56 = arith.constant 0 : index
    %c0_57 = arith.constant 0 : index
    %c0_58 = arith.constant 0 : index
    %138 = vector.load %arg9[%c0_56, %c0_57, %c0_58] : memref<1x1x1xf32, #tpu.memory_space<vmem>>, vector<1x1x1xf32>
    %139 = vector.shape_cast %138 : vector<1x1x1xf32> to vector<1x1xf32>
    %140 = arith.addf %139, %20 : vector<1x1xf32>
    %c0_59 = arith.constant 0 : index
    %c0_60 = arith.constant 0 : index
    %c0_61 = arith.constant 0 : index
    %141 = vector.load %arg9[%c0_59, %c0_60, %c0_61] : memref<1x1x1xf32, #tpu.memory_space<vmem>>, vector<1x1x1xf32>
    %142 = vector.shape_cast %141 : vector<1x1x1xf32> to vector<1x1xf32>
    %143 = vector.shape_cast %140 : vector<1x1xf32> to vector<1x1x1xf32>
    tpu.vector_store %arg9[%c0_59, %c0_60, %c0_61], %143 {strides = array<i32>} : memref<1x1x1xf32, #tpu.memory_space<vmem>>, vector<1x1x1xf32>,
    %c0_62 = arith.constant 0 : index
    %c0_63 = arith.constant 0 : index
    %c0_64 = arith.constant 0 : index
    %144 = vector.load %arg10[%c0_62, %c0_63, %c0_64] : memref<1x1x1xf32, #tpu.memory_space<vmem>>, vector<1x1x1xf32>
    %145 = vector.shape_cast %144 : vector<1x1x1xf32> to vector<1x1xf32>
    %146 = arith.addf %145, %122 : vector<1x1xf32>
    %c0_65 = arith.constant 0 : index
    %c0_66 = arith.constant 0 : index
    %c0_67 = arith.constant 0 : index
    %147 = vector.load %arg10[%c0_65, %c0_66, %c0_67] : memref<1x1x1xf32, #tpu.memory_space<vmem>>, vector<1x1x1xf32>
    %148 = vector.shape_cast %147 : vector<1x1x1xf32> to vector<1x1xf32>
    %149 = vector.shape_cast %146 : vector<1x1xf32> to vector<1x1x1xf32>
    tpu.vector_store %arg10[%c0_65, %c0_66, %c0_67], %149 {strides = array<i32>} : memref<1x1x1xf32, #tpu.memory_space<vmem>>, vector<1x1x1xf32>,
    %c0_68 = arith.constant 0 : index
    %c0_69 = arith.constant 0 : index
    %c0_70 = arith.constant 0 : index
    %150 = vector.load %arg11[%c0_68, %c0_69, %c0_70] : memref<1x1x1xf32, #tpu.memory_space<vmem>>, vector<1x1x1xf32>
    %151 = vector.shape_cast %150 : vector<1x1x1xf32> to vector<1x1xf32>
    %152 = arith.addf %151, %128 : vector<1x1xf32>
    %c0_71 = arith.constant 0 : index
    %c0_72 = arith.constant 0 : index
    %c0_73 = arith.constant 0 : index
    %153 = vector.load %arg11[%c0_71, %c0_72, %c0_73] : memref<1x1x1xf32, #tpu.memory_space<vmem>>, vector<1x1x1xf32>
    %154 = vector.shape_cast %153 : vector<1x1x1xf32> to vector<1x1xf32>
    %155 = vector.shape_cast %152 : vector<1x1xf32> to vector<1x1x1xf32>
    tpu.vector_store %arg11[%c0_71, %c0_72, %c0_73], %155 {strides = array<i32>} : memref<1x1x1xf32, #tpu.memory_space<vmem>>, vector<1x1x1xf32>,
    return
  }
  func.func @transform_0(%arg0: i32, %arg1: i32) -> (i32, i32, i32) {
    %c0_i32 = arith.constant 0 : i32
    %c0_i32_0 = arith.constant 0 : i32
    return %arg0, %c0_i32, %arg1 : i32, i32, i32
  }
  func.func @transform_1(%arg0: i32, %arg1: i32) -> (i32, i32, i32) {
    %c0_i32 = arith.constant 0 : i32
    %c0_i32_0 = arith.constant 0 : i32
    return %arg0, %c0_i32, %arg1 : i32, i32, i32
  }
  func.func @transform_2(%arg0: i32, %arg1: i32) -> (i32, i32, i32) {
    %c0_i32 = arith.constant 0 : i32
    %c0_i32_0 = arith.constant 0 : i32
    return %arg0, %c0_i32, %arg1 : i32, i32, i32
  }
  func.func @transform_3(%arg0: i32, %arg1: i32) -> (i32, i32, i32) {
    %c0_i32 = arith.constant 0 : i32
    %c0_i32_0 = arith.constant 0 : i32
    return %arg0, %c0_i32, %arg1 : i32, i32, i32
  }
  func.func @transform_4(%arg0: i32, %arg1: i32) -> (i32, i32, i32) {
    %c0_i32 = arith.constant 0 : i32
    %c0_i32_0 = arith.constant 0 : i32
    %c0_i32_1 = arith.constant 0 : i32
    return %arg0, %c0_i32, %c0_i32_0 : i32, i32, i32
  }
  func.func @transform_5(%arg0: i32, %arg1: i32) -> (i32, i32) {
    %c0_i32 = arith.constant 0 : i32
    %c0_i32_0 = arith.constant 0 : i32
    return %c0_i32, %arg1 : i32, i32
  }
  func.func @transform_6(%arg0: i32, %arg1: i32) -> (i32, i32, i32) {
    %c0_i32 = arith.constant 0 : i32
    %c0_i32_0 = arith.constant 0 : i32
    %c0_i32_1 = arith.constant 0 : i32
    return %arg0, %c0_i32, %c0_i32_0 : i32, i32, i32
  }
  func.func @transform_7(%arg0: i32, %arg1: i32) -> (i32, i32, i32) {
    %c0_i32 = arith.constant 0 : i32
    %c0_i32_0 = arith.constant 0 : i32
    %c0_i32_1 = arith.constant 0 : i32
    return %arg0, %c0_i32, %c0_i32_0 : i32, i32, i32
  }
  func.func @transform_8(%arg0: i32, %arg1: i32) -> (i32, i32, i32) {
    %c0_i32 = arith.constant 0 : i32
    %c0_i32_0 = arith.constant 0 : i32
    %c0_i32_1 = arith.constant 0 : i32
    return %arg0, %c0_i32, %c0_i32_0 : i32, i32, i32
  }
  func.func @transform_9(%arg0: i32, %arg1: i32) -> (i32, i32, i32) {
    %c0_i32 = arith.constant 0 : i32
    %c0_i32_0 = arith.constant 0 : i32
    %c0_i32_1 = arith.constant 0 : i32
    return %arg0, %c0_i32, %c0_i32_0 : i32, i32, i32
  }
}

</mosaic_0001>

<llo_original>
// kernel: neg.2
$region0: #{neg.2}
  #allocation0 [shape = 's32[1]{0}', space=sflag, size = 0x4, scoped, tag = 'scoped memory for neg.2']
  %s0 = inlined_call_operand.vmem [shape: f32[2,128], index: 0, kind: input, shape index: {}]
  %s1 = inlined_call_operand.vmem [shape: f32[2,128], index: 1, kind: output, shape index: {}]
  %v2 = vld [vmem:[%s0] sm:$0x3]
  %3 = xla_tuple %v2
  %4 = xla_tuple %3
  %v5 = vxor.u32 %v2, 2147483648
  %6 = xla_tuple %v5
  %7 = vst [vmem:[%s1] sm:$0x3] %v5

// kernel: multibox_loss.4
$region0: #{multibox_loss.4}
  #allocation0 [shape = 'u32[]', space=smem, size = 0x4, offset = 0x4, fixed_abs, tag = 'smem constant byte address 0x4 - core index']
  #allocation1 [shape = 'u32[144,128]{1,0:T(1,128)}', space=vmem, size = 0x12000, scoped, tag = 'internal scratch']
  %s0 = inlined_call_operand.vmem [shape: f32[2,2,128], index: 0, kind: input, shape index: {}]
  %s1 = inlined_call_operand.vmem [shape: s32[2,1,128], index: 1, kind: input, shape index: {}]
  %s2 = inlined_call_operand.vmem [shape: f32[2,3,128], index: 2, kind: output, shape index: {}]
  %s3 = sld [smem:[#allocation0]]
  $region41: #{multibox_loss.4} parent=0
    _
  %s5 = ssub.s32 1, %s3
  %s6 = scalar_select 0, %s5, %s3
  loop: start=0, step=1, limit=4
  $region2: #{multibox_loss.4} parent=0 // loop_pre_header
    _
  $region3: #{multibox_loss.4} parent=0 // loop_header
    %s8 = sphi 0, %s12
    %p9 = scmp.ge.s32.totalorder %s8, 4
    %s15 = sphi 0, %s27
    %s16 = sphi 0, %s23
    %s17 = sphi 0, %s15
    %s18 = sphi 0, %s16
    %s19 = sphi 0, %s17
    %s20 = sphi 0, %s18
    %s32 = sphi 0, %s34
    %s35 = sphi 0, %s32
    %s36 = sphi 0, %s35
    %s52 = sphi 0, %s36
    %s60 = sphi 0, %s62
    %s63 = sphi 0, %s60
    %s64 = sphi 0, %s63
    %s80 = sphi 0, %s64
    %s88 = sphi 0, %s90
    %s91 = sphi 0, %s88
    %s92 = sphi 0, %s91
    %s108 = sphi 0, %s92
  $region4: #{multibox_loss.4} parent=0 // loop_header_branch
    %11 = sbr.rel (%p9) target = $region8
  $region5: #{multibox_loss.4} parent=0 // loop_body
    %s13 = ssub.s32 %s8, 1
    %s14 = ssub.s32 %s8, 2
    %s21 = sadd.s32 1, %s16
    %p22 = scmp.ge.s32.totalorder %s21, 1
    %s23 = scalar_select %p22, 0, %s21
    %s24 = sadd.s32 1, %s15
    %s25 = scalar_select %p22, %s24, %s15
    %p26 = scmp.ge.s32.totalorder %s25, 2
    %s27 = scalar_select %p26, 0, %s25
    %s28 = ssub.s32 %s15, %s27
    %s29 = ssub.s32 %s16, %s23
    %s30 = sor.u32 %s28, %s29
    %p31 = scmp.eq.s32.totalorder %s30, 0
    %s33 = sadd.s32 %s32, 1
    %s34 = scalar_select %p31, %s32, %s33
    %p37 = pneg %p31
    %p38 = scmp.eq.s32.totalorder %s8, 1
    %p39 = por %p37, %p38
    %p40 = scmp.ne.s32.totalorder %s32, %s35
    %p41 = scmp.eq.s32.totalorder %s8, 0
    %p42 = por %p40, %p41
    %p43 = scmp.ne.s32.totalorder %s32, %s35
    %p44 = scmp.eq.s32.totalorder %s13, 1
    %p45 = por %p43, %p44
    %p46 = scmp.ne.s32.totalorder %s35, %s36
    %p47 = scmp.eq.s32.totalorder %s13, 0
    %p48 = por %p46, %p47
    %p49 = scmp.ne.s32.totalorder %s35, %s36
    %p50 = scmp.eq.s32.totalorder %s14, 1
    %p51 = por %p49, %p50
    %p53 = scmp.ne.s32.totalorder %s36, %s52
    %p54 = scmp.eq.s32.totalorder %s14, 0
    %p55 = por %p53, %p54
    %s56 = ssub.s32 %s15, %s27
    %s57 = ssub.s32 %s16, %s23
    %s58 = sor.u32 %s56, %s57
    %p59 = scmp.eq.s32.totalorder %s58, 0
    %s61 = sadd.s32 %s60, 1
    %s62 = scalar_select %p59, %s60, %s61
    %p65 = pneg %p59
    %p66 = scmp.eq.s32.totalorder %s8, 1
    %p67 = por %p65, %p66
    %p68 = scmp.ne.s32.totalorder %s60, %s63
    %p69 = scmp.eq.s32.totalorder %s8, 0
    %p70 = por %p68, %p69
    %p71 = scmp.ne.s32.totalorder %s60, %s63
    %p72 = scmp.eq.s32.totalorder %s13, 1
    %p73 = por %p71, %p72
    %p74 = scmp.ne.s32.totalorder %s63, %s64
    %p75 = scmp.eq.s32.totalorder %s13, 0
    %p76 = por %p74, %p75
    %p77 = scmp.ne.s32.totalorder %s63, %s64
    %p78 = scmp.eq.s32.totalorder %s14, 1
    %p79 = por %p77, %p78
    %p81 = scmp.ne.s32.totalorder %s64, %s80
    %p82 = scmp.eq.s32.totalorder %s14, 0
    %p83 = por %p81, %p82
    %s84 = ssub.s32 %s15, %s27
    %s85 = ssub.s32 %s16, %s23
    %s86 = sor.u32 %s84, %s85
    %p87 = scmp.eq.s32.totalorder %s86, 0
    %s89 = sadd.s32 %s88, 1
    %s90 = scalar_select %p87, %s88, %s89
    %p93 = pneg %p87
    %p94 = scmp.eq.s32.totalorder %s8, 1
    %p95 = por %p93, %p94
    %p96 = scmp.ne.s32.totalorder %s88, %s91
    %p97 = scmp.eq.s32.totalorder %s8, 0
    %p98 = por %p96, %p97
    %p99 = scmp.ne.s32.totalorder %s88, %s91
    %p100 = scmp.eq.s32.totalorder %s13, 1
    %p101 = por %p99, %p100
    %p102 = scmp.ne.s32.totalorder %s91, %s92
    %p103 = scmp.eq.s32.totalorder %s13, 0
    %p104 = por %p102, %p103
    %p105 = scmp.ne.s32.totalorder %s91, %s92
    %p106 = scmp.eq.s32.totalorder %s14, 1
    %p107 = por %p105, %p106
    %p109 = scmp.ne.s32.totalorder %s92, %s108
    %p110 = scmp.eq.s32.totalorder %s14, 0
    %p111 = por %p109, %p110
    %p112 = scmp.le.s32.totalorder 1, %s8
    %p113 = scmp.lt.s32.totalorder %s8, 3
    %p114 = pnand %p112, %p113
    %p115 = pneg %p114
    // Predicated region
    $region9: #{multibox_loss.4} parent=5 // pred_check
      _
    $region10: #{multibox_loss.4} parent=5 // pred_check_branch
      %117 = sbr.rel (%p114) target = $region12
    $region11: #{multibox_loss.4} parent=5 // pred_region
      %s118 = ssub.s32 %s8, 1
    $region12: #{multibox_loss.4} parent=5 // pred_fallthru
      _
    %p119 = scmp.lt.s32.totalorder %s8, 2
    // Predicated region
    $region13: #{multibox_loss.4} parent=5 // pred_check
      %p120 = pneg %p119
    $region14: #{multibox_loss.4} parent=5 // pred_check_branch
      %122 = sbr.rel (%p120) target = $region16
    $region15: #{multibox_loss.4} parent=5 // pred_region
      // Predicated region
      $region17: #{multibox_loss.4} parent=15 // pred_check
        %p123 = pneg %p42
      $region18: #{multibox_loss.4} parent=15 // pred_check_branch
        %125 = sbr.rel (%p123) target = $region20
      $region19: #{multibox_loss.4} parent=15 // pred_region
        %p126 = scmp.lt.s32.totalorder %s15, 1
        %s127 = scalar_select %p126, %s15, 1
        %p128 = scmp.lt.s32.totalorder %s16, 0
        %s129 = scalar_select %p128, %s16, 0
        %s130 = sadd.s32 %s129, %s127
        %s131 = smul.addr %s130, 2
        %s132 = scalar_lea.vmem %s0, %s131
      $region20: #{multibox_loss.4} parent=15 // pred_fallthru
        _
      // Predicated region
      $region21: #{multibox_loss.4} parent=15 // pred_check
        %p133 = pneg %p70
      $region22: #{multibox_loss.4} parent=15 // pred_check_branch
        %135 = sbr.rel (%p133) target = $region24
      $region23: #{multibox_loss.4} parent=15 // pred_region
        %p136 = scmp.lt.s32.totalorder %s15, 1
        %s137 = scalar_select %p136, %s15, 1
        %p138 = scmp.lt.s32.totalorder %s16, 0
        %s139 = scalar_select %p138, %s16, 0
        %s140 = sadd.s32 %s139, %s137
        %s141 = scalar_lea.vmem %s1, %s140
      $region24: #{multibox_loss.4} parent=15 // pred_fallthru
        _
    $region16: #{multibox_loss.4} parent=5 // pred_fallthru
      _
    %p142 = scmp.le.s32.totalorder 1, %s8
    %p143 = scmp.lt.s32.totalorder %s8, 3
    %p144 = pnand %p142, %p143
    %p145 = pneg %p144
    // Predicated region
    $region25: #{multibox_loss.4} parent=5 // pred_check
      _
    $region26: #{multibox_loss.4} parent=5 // pred_check_branch
      %147 = sbr.rel (%p144) target = $region28
    $region27: #{multibox_loss.4} parent=5 // pred_region
      %s148 = ssub.s32 %s8, 1
      %p149 = scmp.lt.s32.totalorder %s17, 1
      %s150 = scalar_select %p149, %s17, 1
      %p151 = scmp.lt.s32.totalorder %s18, 0
      %s152 = scalar_select %p151, %s18, 0
      %s153 = sadd.s32 %s152, %s150
      %s154 = smul.addr %s153, 2
      %s155 = scalar_lea.vmem %s0, %s154
      %p156 = pneg %p48
      %p157 = pneg %p45
      %p158 = scmp.lt.s32.totalorder %s17, 1
      %s159 = scalar_select %p158, %s17, 1
      %p160 = scmp.lt.s32.totalorder %s18, 0
      %s161 = scalar_select %p160, %s18, 0
      %s162 = sadd.s32 %s161, %s159
      %s163 = scalar_lea.vmem %s1, %s162
      %p164 = pneg %p76
      %p165 = pneg %p73
      %p166 = pneg %p104
      %p167 = pneg %p101
      %p168 = scmp.lt.s32.totalorder %s17, 1
      %s169 = scalar_select %p168, %s17, 1
      %p170 = scmp.lt.s32.totalorder %s18, 0
      %s171 = scalar_select %p170, %s18, 0
      %s172 = sadd.s32 %s171, %s169
      %s173 = smul.addr %s172, 4
      %s174 = scalar_lea.vmem %s2, %s173
      %p175 = scmp.lt.s32.totalorder %s17, 1
      %s176 = scalar_select %p175, %s17, 1
      %p177 = scmp.lt.s32.totalorder %s18, 0
      %s178 = scalar_select %p177, %s18, 0
      %s179 = sadd.s32 %s178, %s176
      %s180 = smul.addr %s179, 2
      %s181 = scalar_lea.vmem %s0, %s180
      %p182 = scmp.lt.s32.totalorder %s17, 1
      %s183 = scalar_select %p182, %s17, 1
      %p184 = scmp.lt.s32.totalorder %s18, 0
      %s185 = scalar_select %p184, %s18, 0
      %s186 = sadd.s32 %s185, %s183
      %s187 = scalar_lea.vmem %s1, %s186
      %p188 = scmp.lt.s32.totalorder %s17, 1
      %s189 = scalar_select %p188, %s17, 1
      %p190 = scmp.lt.s32.totalorder %s18, 0
      %s191 = scalar_select %p190, %s18, 0
      %s192 = sadd.s32 %s191, %s189
      %s193 = smul.addr %s192, 4
      %s194 = scalar_lea.vmem %s2, %s193
      %v195 = vld [vmem:[%s181] sm:$0x3]
      %v196 = vld [vmem:[%s187] sm:$0x1]
      %v198 = vrot.slane %v195, 7
      %v200 = vsub.f32 %v195, %v198
      %v201 = vand.u32 2147483647, %v200
      %v202 = vsub.f32 0.0, %v201
      %v203 = vmul.f32 %v202, 1.442695
      %v204 = vpow.pop %v203
      %v205 = vadd.f32 %v204, 1.0
      %v206 = vlog2.pop %v205
      %v207 = vmul.f32 %v206, 0.6931472
      %v208 = vmax.f32 %v200, 0.0
      %v209 = vadd.f32 %v208, %v207
      %v210 = vsub.f32 0.0, %v200
      %v211 = vmax.f32 %v210, 0.0
      %v212 = vadd.f32 %v211, %v207
      %vm213 = vcmp.gt.s32.totalorder %v196, 0
      %v216 = vunpack.c.l.s4 1966171168
      %v217 = vunpack.c.0.s8 %v216
      %v218 = vlaneseq
      %v219 = vshrl.u32 %v218, 7
      %v220 = vsub.s32 %v217, %v219
      %v221 = vrot.slane %v212, %v220
      %v222 = vcombine.high %v221, %v221
      %v224 = vunpack.c.l.s4 1966171168
      %v225 = vunpack.c.0.s8 %v224
      %v226 = vlaneseq
      %v227 = vshrl.u32 %v226, 7
      %v228 = vsub.s32 %v225, %v227
      %v229 = vrot.slane %v222, %v228
      %v233 = vunpack.c.l.s4 1966171168
      %v234 = vunpack.c.0.s8 %v233
      %v235 = vlaneseq
      %v236 = vshrl.u32 %v235, 7
      %v237 = vsub.s32 %v234, %v236
      %v238 = vrot.slane %v209, %v237
      %v239 = vcombine.high %v238, %v238
      %v241 = vunpack.c.l.s4 1966171168
      %v242 = vunpack.c.0.s8 %v241
      %v243 = vlaneseq
      %v244 = vshrl.u32 %v243, 7
      %v245 = vsub.s32 %v242, %v244
      %v246 = vrot.slane %v239, %v245
      %v248 = vsel %vm213, %v229, %v246
      %v249 = vsel %vm213, 0.0, %v246
      %250 = vst [vmem:[%s194] sm:$0x1] %v249
      %251 = vst [vmem:[%s194 + $0x1] sm:$0x1] %v248
      %252 = vst [vmem:[%s194 + $0x1] sm:$0x2] %v209
      %p253 = scmp.lt.s32.totalorder %s17, 1
      %s254 = scalar_select %p253, %s17, 1
      %p255 = scmp.lt.s32.totalorder %s18, 0
      %s256 = scalar_select %p255, %s18, 0
      %s257 = sadd.s32 %s256, %s254
      %s258 = smul.addr %s257, 4
      %s259 = scalar_lea.vmem %s2, %s258
      // Predicated region
      $region29: #{multibox_loss.4} parent=27 // pred_check
        %p260 = pneg %p101
      $region30: #{multibox_loss.4} parent=27 // pred_check_branch
        %262 = sbr.rel (%p260) target = $region32
      $region31: #{multibox_loss.4} parent=27 // pred_region
        _
      $region32: #{multibox_loss.4} parent=27 // pred_fallthru
        _
    $region28: #{multibox_loss.4} parent=5 // pred_fallthru
      _
    %p263 = scmp.le.s32.totalorder 2, %s8
    // Predicated region
    $region33: #{multibox_loss.4} parent=5 // pred_check
      %p264 = pneg %p263
    $region34: #{multibox_loss.4} parent=5 // pred_check_branch
      %266 = sbr.rel (%p264) target = $region36
    $region35: #{multibox_loss.4} parent=5 // pred_region
      %s267 = ssub.s32 %s8, 2
      // Predicated region
      $region37: #{multibox_loss.4} parent=35 // pred_check
        %p268 = pneg %p107
      $region38: #{multibox_loss.4} parent=35 // pred_check_branch
        %270 = sbr.rel (%p268) target = $region40
      $region39: #{multibox_loss.4} parent=35 // pred_region
        %p271 = scmp.lt.s32.totalorder %s19, 1
        %s272 = scalar_select %p271, %s19, 1
        %p273 = scmp.lt.s32.totalorder %s20, 0
        %s274 = scalar_select %p273, %s20, 0
        %s275 = sadd.s32 %s274, %s272
        %s276 = smul.addr %s275, 4
        %s277 = scalar_lea.vmem %s2, %s276
      $region40: #{multibox_loss.4} parent=35 // pred_fallthru
        _
    $region36: #{multibox_loss.4} parent=5 // pred_fallthru
      _
  $region6: #{multibox_loss.4} parent=0 // loop_footer
    %s12 = sadd.s32 1, %s8
  $region7: #{multibox_loss.4} parent=0 // loop_footer_branch
    %7 = sbr.rel target = $region3
  $region8: #{multibox_loss.4} parent=0 // loop_exit
    _

// kernel: multibox_loss.3
$region0: #{multibox_loss.3}
  #allocation0 [shape = 'u32[]', space=smem, size = 0x4, offset = 0x4, fixed_abs, tag = 'smem constant byte address 0x4 - core index']
  #allocation1 [shape = 'u32[144,128]{1,0:T(1,128)}', space=vmem, size = 0x12000, scoped, tag = 'internal scratch']
  #allocation2 [shape = 'f32[8,1]{1,0:T(8,128)}', space=vmem, size = 0x1000, scoped, tag = 'scratch operand']
  #allocation3 [shape = 's32[8,1]{1,0:T(8,128)}', space=vmem, size = 0x1000, scoped, tag = 'scratch operand']
  %s0 = inlined_call_operand.vmem [shape: f32[2,8,4], index: 0, kind: input, shape index: {}]
  %s1 = inlined_call_operand.vmem [shape: f32[4,128], index: 1, kind: input, shape index: {}]
  %s2 = inlined_call_operand.vmem [shape: f32[2,1,128], index: 2, kind: output, shape index: {0}]
  %s3 = inlined_call_operand.vmem [shape: s32[2,1,128], index: 3, kind: output, shape index: {1}]
  %s4 = inlined_call_operand.vmem [shape: s32[2,8,1], index: 4, kind: output, shape index: {2}]
  %5 = xla_tuple %s2, %s3, %s4
  %s6 = sld [smem:[#allocation0]]
  $region69: #{multibox_loss.3} parent=0
    _
  %s8 = ssub.s32 1, %s6
  %s9 = scalar_select 0, %s8, %s6
  loop: start=0, step=1, limit=4
  $region2: #{multibox_loss.3} parent=0 // loop_pre_header
    _
  $region3: #{multibox_loss.3} parent=0 // loop_header
    %s11 = sphi 0, %s15
    %p12 = scmp.ge.s32.totalorder %s11, 4
    %s18 = sphi 0, %s30
    %s19 = sphi 0, %s26
    %s20 = sphi 0, %s18
    %s21 = sphi 0, %s19
    %s22 = sphi 0, %s20
    %s23 = sphi 0, %s21
    %s33 = sphi 0, %s35
    %s36 = sphi 0, %s33
    %s37 = sphi 0, %s36
    %s53 = sphi 0, %s37
    %s59 = sphi 0, %s61
    %s62 = sphi 0, %s59
    %s63 = sphi 0, %s62
    %s79 = sphi 0, %s63
    %s87 = sphi 0, %s89
    %s90 = sphi 0, %s87
    %s91 = sphi 0, %s90
    %s107 = sphi 0, %s91
    %s115 = sphi 0, %s117
    %s118 = sphi 0, %s115
    %s119 = sphi 0, %s118
    %s135 = sphi 0, %s119
    %s141 = sphi 0, %s143
    %s144 = sphi 0, %s141
    %s145 = sphi 0, %s144
    %s161 = sphi 0, %s145
  $region4: #{multibox_loss.3} parent=0 // loop_header_branch
    %14 = sbr.rel (%p12) target = $region8
  $region5: #{multibox_loss.3} parent=0 // loop_body
    %s16 = ssub.s32 %s11, 1
    %s17 = ssub.s32 %s11, 2
    %s24 = sadd.s32 1, %s19
    %p25 = scmp.ge.s32.totalorder %s24, 1
    %s26 = scalar_select %p25, 0, %s24
    %s27 = sadd.s32 1, %s18
    %s28 = scalar_select %p25, %s27, %s18
    %p29 = scmp.ge.s32.totalorder %s28, 2
    %s30 = scalar_select %p29, 0, %s28
    %s31 = ssub.s32 %s18, %s30
    %p32 = scmp.eq.s32.totalorder %s31, 0
    %s34 = sadd.s32 %s33, 1
    %s35 = scalar_select %p32, %s33, %s34
    %p38 = pneg %p32
    %p39 = scmp.eq.s32.totalorder %s11, 1
    %p40 = por %p38, %p39
    %p41 = scmp.ne.s32.totalorder %s33, %s36
    %p42 = scmp.eq.s32.totalorder %s11, 0
    %p43 = por %p41, %p42
    %p44 = scmp.ne.s32.totalorder %s33, %s36
    %p45 = scmp.eq.s32.totalorder %s16, 1
    %p46 = por %p44, %p45
    %p47 = scmp.ne.s32.totalorder %s36, %s37
    %p48 = scmp.eq.s32.totalorder %s16, 0
    %p49 = por %p47, %p48
    %p50 = scmp.ne.s32.totalorder %s36, %s37
    %p51 = scmp.eq.s32.totalorder %s17, 1
    %p52 = por %p50, %p51
    %p54 = scmp.ne.s32.totalorder %s37, %s53
    %p55 = scmp.eq.s32.totalorder %s17, 0
    %p56 = por %p54, %p55
    %s57 = ssub.s32 %s19, %s26
    %p58 = scmp.eq.s32.totalorder %s57, 0
    %s60 = sadd.s32 %s59, 1
    %s61 = scalar_select %p58, %s59, %s60
    %p64 = pneg %p58
    %p65 = scmp.eq.s32.totalorder %s11, 1
    %p66 = por %p64, %p65
    %p67 = scmp.ne.s32.totalorder %s59, %s62
    %p68 = scmp.eq.s32.totalorder %s11, 0
    %p69 = por %p67, %p68
    %p70 = scmp.ne.s32.totalorder %s59, %s62
    %p71 = scmp.eq.s32.totalorder %s16, 1
    %p72 = por %p70, %p71
    %p73 = scmp.ne.s32.totalorder %s62, %s63
    %p74 = scmp.eq.s32.totalorder %s16, 0
    %p75 = por %p73, %p74
    %p76 = scmp.ne.s32.totalorder %s62, %s63
    %p77 = scmp.eq.s32.totalorder %s17, 1
    %p78 = por %p76, %p77
    %p80 = scmp.ne.s32.totalorder %s63, %s79
    %p81 = scmp.eq.s32.totalorder %s17, 0
    %p82 = por %p80, %p81
    %s83 = ssub.s32 %s18, %s30
    %s84 = ssub.s32 %s19, %s26
    %s85 = sor.u32 %s83, %s84
    %p86 = scmp.eq.s32.totalorder %s85, 0
    %s88 = sadd.s32 %s87, 1
    %s89 = scalar_select %p86, %s87, %s88
    %p92 = pneg %p86
    %p93 = scmp.eq.s32.totalorder %s11, 1
    %p94 = por %p92, %p93
    %p95 = scmp.ne.s32.totalorder %s87, %s90
    %p96 = scmp.eq.s32.totalorder %s11, 0
    %p97 = por %p95, %p96
    %p98 = scmp.ne.s32.totalorder %s87, %s90
    %p99 = scmp.eq.s32.totalorder %s16, 1
    %p100 = por %p98, %p99
    %p101 = scmp.ne.s32.totalorder %s90, %s91
    %p102 = scmp.eq.s32.totalorder %s16, 0
    %p103 = por %p101, %p102
    %p104 = scmp.ne.s32.totalorder %s90, %s91
    %p105 = scmp.eq.s32.totalorder %s17, 1
    %p106 = por %p104, %p105
    %p108 = scmp.ne.s32.totalorder %s91, %s107
    %p109 = scmp.eq.s32.totalorder %s17, 0
    %p110 = por %p108, %p109
    %s111 = ssub.s32 %s18, %s30
    %s112 = ssub.s32 %s19, %s26
    %s113 = sor.u32 %s111, %s112
    %p114 = scmp.eq.s32.totalorder %s113, 0
    %s116 = sadd.s32 %s115, 1
    %s117 = scalar_select %p114, %s115, %s116
    %p120 = pneg %p114
    %p121 = scmp.eq.s32.totalorder %s11, 1
    %p122 = por %p120, %p121
    %p123 = scmp.ne.s32.totalorder %s115, %s118
    %p124 = scmp.eq.s32.totalorder %s11, 0
    %p125 = por %p123, %p124
    %p126 = scmp.ne.s32.totalorder %s115, %s118
    %p127 = scmp.eq.s32.totalorder %s16, 1
    %p128 = por %p126, %p127
    %p129 = scmp.ne.s32.totalorder %s118, %s119
    %p130 = scmp.eq.s32.totalorder %s16, 0
    %p131 = por %p129, %p130
    %p132 = scmp.ne.s32.totalorder %s118, %s119
    %p133 = scmp.eq.s32.totalorder %s17, 1
    %p134 = por %p132, %p133
    %p136 = scmp.ne.s32.totalorder %s119, %s135
    %p137 = scmp.eq.s32.totalorder %s17, 0
    %p138 = por %p136, %p137
    %s139 = ssub.s32 %s18, %s30
    %p140 = scmp.eq.s32.totalorder %s139, 0
    %s142 = sadd.s32 %s141, 1
    %s143 = scalar_select %p140, %s141, %s142
    %p146 = pneg %p140
    %p147 = scmp.eq.s32.totalorder %s11, 1
    %p148 = por %p146, %p147
    %p149 = scmp.ne.s32.totalorder %s141, %s144
    %p150 = scmp.eq.s32.totalorder %s11, 0
    %p151 = por %p149, %p150
    %p152 = scmp.ne.s32.totalorder %s141, %s144
    %p153 = scmp.eq.s32.totalorder %s16, 1
    %p154 = por %p152, %p153
    %p155 = scmp.ne.s32.totalorder %s144, %s145
    %p156 = scmp.eq.s32.totalorder %s16, 0
    %p157 = por %p155, %p156
    %p158 = scmp.ne.s32.totalorder %s144, %s145
    %p159 = scmp.eq.s32.totalorder %s17, 1
    %p160 = por %p158, %p159
    %p162 = scmp.ne.s32.totalorder %s145, %s161
    %p163 = scmp.eq.s32.totalorder %s17, 0
    %p164 = por %p162, %p163
    %p165 = scmp.le.s32.totalorder 1, %s11
    %p166 = scmp.lt.s32.totalorder %s11, 3
    %p167 = pnand %p165, %p166
    %p168 = pneg %p167
    // Predicated region
    $region9: #{multibox_loss.3} parent=5 // pred_check
      _
    $region10: #{multibox_loss.3} parent=5 // pred_check_branch
      %170 = sbr.rel (%p167) target = $region12
    $region11: #{multibox_loss.3} parent=5 // pred_region
      %s171 = ssub.s32 %s11, 1
      // Predicated region
      $region13: #{multibox_loss.3} parent=11 // pred_check
        %p172 = pneg %p75
      $region14: #{multibox_loss.3} parent=11 // pred_check_branch
        %174 = sbr.rel (%p172) target = $region16
      $region15: #{multibox_loss.3} parent=11 // pred_region
        %p175 = scmp.lt.s32.totalorder %s21, 0
        %s176 = scalar_select %p175, %s21, 0
        %s177 = smul.addr %s176, 4
        %s178 = scalar_lea.vmem %s1, %s177
      $region16: #{multibox_loss.3} parent=11 // pred_fallthru
        _
    $region12: #{multibox_loss.3} parent=5 // pred_fallthru
      _
    %p179 = scmp.lt.s32.totalorder %s11, 2
    // Predicated region
    $region17: #{multibox_loss.3} parent=5 // pred_check
      %p180 = pneg %p179
    $region18: #{multibox_loss.3} parent=5 // pred_check_branch
      %182 = sbr.rel (%p180) target = $region20
    $region19: #{multibox_loss.3} parent=5 // pred_region
      // Predicated region
      $region21: #{multibox_loss.3} parent=19 // pred_check
        %p183 = pneg %p43
      $region22: #{multibox_loss.3} parent=19 // pred_check_branch
        %185 = sbr.rel (%p183) target = $region24
      $region23: #{multibox_loss.3} parent=19 // pred_region
        %p186 = scmp.lt.s32.totalorder %s18, 1
        %s187 = scalar_select %p186, %s18, 1
        %s188 = smul.addr %s187, 8
        %s189 = scalar_lea.vmem %s0, %s188
      $region24: #{multibox_loss.3} parent=19 // pred_fallthru
        _
    $region20: #{multibox_loss.3} parent=5 // pred_fallthru
      _
    %p190 = scmp.le.s32.totalorder 1, %s11
    %p191 = scmp.lt.s32.totalorder %s11, 3
    %p192 = pnand %p190, %p191
    %p193 = pneg %p192
    // Predicated region
    $region25: #{multibox_loss.3} parent=5 // pred_check
      _
    $region26: #{multibox_loss.3} parent=5 // pred_check_branch
      %195 = sbr.rel (%p192) target = $region28
    $region27: #{multibox_loss.3} parent=5 // pred_region
      %s196 = ssub.s32 %s11, 1
      %p197 = scmp.lt.s32.totalorder %s20, 1
      %s198 = scalar_select %p197, %s20, 1
      %s199 = smul.addr %s198, 8
      %s200 = scalar_lea.vmem %s0, %s199
      %p201 = pneg %p49
      %p202 = pneg %p46
      %p203 = scmp.lt.s32.totalorder %s21, 0
      %s204 = scalar_select %p203, %s21, 0
      %s205 = smul.addr %s204, 4
      %s206 = scalar_lea.vmem %s1, %s205
      %p207 = pneg %p75
      %p208 = pneg %p72
      %p209 = pneg %p103
      %p210 = pneg %p100
      %p211 = scmp.lt.s32.totalorder %s20, 1
      %s212 = scalar_select %p211, %s20, 1
      %p213 = scmp.lt.s32.totalorder %s21, 0
      %s214 = scalar_select %p213, %s21, 0
      %s215 = sadd.s32 %s214, %s212
      %s216 = scalar_lea.vmem %s2, %s215
      %p217 = pneg %p131
      %p218 = pneg %p128
      %p219 = scmp.lt.s32.totalorder %s20, 1
      %s220 = scalar_select %p219, %s20, 1
      %p221 = scmp.lt.s32.totalorder %s21, 0
      %s222 = scalar_select %p221, %s21, 0
      %s223 = sadd.s32 %s222, %s220
      %s224 = scalar_lea.vmem %s3, %s223
      %p225 = pneg %p157
      %p226 = pneg %p154
      %p227 = scmp.lt.s32.totalorder %s20, 1
      %s228 = scalar_select %p227, %s20, 1
      %s229 = smul.addr %s228, 8
      %s230 = scalar_lea.vmem %s4, %s229
      %p231 = scmp.lt.s32.totalorder %s20, 1
      %s232 = scalar_select %p231, %s20, 1
      %s233 = smul.addr %s232, 8
      %s234 = scalar_lea.vmem %s0, %s233
      %p235 = scmp.lt.s32.totalorder %s21, 0
      %s236 = scalar_select %p235, %s21, 0
      %s237 = smul.addr %s236, 4
      %s238 = scalar_lea.vmem %s1, %s237
      %p239 = scmp.lt.s32.totalorder %s20, 1
      %s240 = scalar_select %p239, %s20, 1
      %p241 = scmp.lt.s32.totalorder %s21, 0
      %s242 = scalar_select %p241, %s21, 0
      %s243 = sadd.s32 %s242, %s240
      %s244 = scalar_lea.vmem %s2, %s243
      %p245 = scmp.lt.s32.totalorder %s20, 1
      %s246 = scalar_select %p245, %s20, 1
      %p247 = scmp.lt.s32.totalorder %s21, 0
      %s248 = scalar_select %p247, %s21, 0
      %s249 = sadd.s32 %s248, %s246
      %s250 = scalar_lea.vmem %s3, %s249
      %p251 = scmp.lt.s32.totalorder %s20, 1
      %s252 = scalar_select %p251, %s20, 1
      %s253 = smul.addr %s252, 8
      %s254 = scalar_lea.vmem %s4, %s253
      %v255 = vld [vmem:[%s234] sm:$0xff]
      %v256 = vld [vmem:[%s238] sm:$0x1]
      %v257 = vld [vmem:[%s238 + $0x1] sm:$0x1]
      %v258 = vld [vmem:[%s238 + $0x2] sm:$0x1]
      %v259 = vld [vmem:[%s238 + $0x3] sm:$0x1]
      %v260 = vlaneseq
      %v261 = vshrl.u32 %v260, 7
      %v262 = vsub.s32 0, %v261
      %v263 = vrot.slane %v258, %v262
      %265 = vset.pattern.permute.xlu0 2
      %266 = vperm.xlu0 %265, %v255
      %v267 = vpop.permute.xlu0 %266
      %v269 = vmin.f32 %v263, %v267
      %v270 = vlaneseq
      %v271 = vshrl.u32 %v270, 7
      %v272 = vsub.s32 0, %v271
      %v273 = vrot.slane %v256, %v272
      %274 = vset.pattern.permute.xlu0 0
      %275 = vperm.xlu0 %274, %v255
      %v276 = vpop.permute.xlu0 %275
      %v278 = vmax.f32 %v273, %v276
      %v279 = vsub.f32 %v269, %v278
      %v280 = vmax.f32 %v279, 0.0
      %v281 = vlaneseq
      %v282 = vshrl.u32 %v281, 7
      %v283 = vsub.s32 0, %v282
      %v284 = vrot.slane %v259, %v283
      %285 = vset.pattern.permute.xlu0 3
      %286 = vperm.xlu0 %285, %v255
      %v287 = vpop.permute.xlu0 %286
      %v289 = vmin.f32 %v284, %v287
      %v290 = vlaneseq
      %v291 = vshrl.u32 %v290, 7
      %v292 = vsub.s32 0, %v291
      %v293 = vrot.slane %v257, %v292
      %294 = vset.pattern.permute.xlu0 1
      %295 = vperm.xlu0 %294, %v255
      %v296 = vpop.permute.xlu0 %295
      %v298 = vmax.f32 %v293, %v296
      %v299 = vsub.f32 %v289, %v298
      %v300 = vmax.f32 %v299, 0.0
      %v301 = vmul.f32 %v280, %v300
      %302 = vrot.lane.b32.xlu0 %v255, 2
      %v303 = vpop.permute.xlu0 %302
      %v305 = vsub.f32 %v255, %v303
      %307 = vrot.lane.b32.xlu0 %v305, 127
      %v308 = vpop.permute.xlu0 %307
      %v310 = vmul.f32 %v305, %v308
      %v311 = vsub.f32 %v258, %v256
      %v312 = vsub.f32 %v259, %v257
      %v313 = vmul.f32 %v311, %v312
      %315 = vset.pattern.permute.xlu0 2
      %316 = vperm.xlu0 %315, %v310
      %v317 = vpop.permute.xlu0 %316
      %v319 = vlaneseq
      %v320 = vshrl.u32 %v319, 7
      %v321 = vsub.s32 0, %v320
      %v322 = vrot.slane %v313, %v321
      %v323 = vadd.f32 %v317, %v322
      %v324 = vsub.f32 %v323, %v301
      %v325 = vadd.f32 %v324, 1e-12
      %v326 = vrcp.pop %v325
      %v327 = vmul.f32 %v301, %v326
      %v328 = vrot.slane %v327, 4
      %v329 = vmax.f32 %v327, %v328
      %v330 = vrot.slane %v329, 2
      %v331 = vmax.f32 %v329, %v330
      %v332 = vrot.slane %v331, 1
      %v333 = vmax.f32 %v331, %v332
      %v334 = vlaneseq
      %v335 = vshrl.u32 %v334, 7
      %vm336 = vcmp.eq.f32.partialorder %v327, %v333
      %v337 = vsel %vm336, %v335, 8
      %v338 = vrot.slane %v337, 4
      %vm339 = vcmp.lt.s32.totalorder %v337, %v338
      %v340 = vsel %vm339, %v337, %v338
      %v341 = vrot.slane %v340, 2
      %vm342 = vcmp.lt.s32.totalorder %v340, %v341
      %v343 = vsel %vm342, %v340, %v341
      %v344 = vrot.slane %v343, 1
      %vm345 = vcmp.lt.s32.totalorder %v343, %v344
      %v346 = vsel %vm345, %v343, %v344
      %347 = vst [vmem:[%s244] sm:$0x1] %v333
      %348 = vst [vmem:[%s250] sm:$0x1] %v346
      %349 = vmax.xlane.f32.xlu0 %v327
      %v350 = vpop.xlane.xlu0 %349
      %v351 = vlaneseq
      %v352 = vand.u32 %v351, 127
      %vm353 = vcmp.eq.f32.partialorder %v327, %v350
      %v354 = vsel %vm353, %v352, 128
      %v355 = vand.u32 %v354, 65535
      %v356 = vshra.s32 %v354, 16
      %v357 = vcvt.s32.f32 %v355
      %v358 = vcvt.s32.f32 %v356
      %359 = vmin.xlane.f32.xlu0 %v358
      %v360 = vpop.xlane.xlu0 %359
      %vm361 = vcmp.eq.f32.partialorder %v358, %v360
      %v362 = vsel %vm361, %v357, inf
      %363 = vmin.xlane.f32.xlu0 %v362
      %v364 = vpop.xlane.xlu0 %363
      %v365 = vcvt.f32.s32 %v364
      %v366 = vcvt.f32.s32 %v360
      %v367 = vshll.u32 %v366, 16
      %v368 = vadd.s32 %v367, %v365
      %s369 = smul.u32 %s21, 128
      %v370 = vstv %s369
      %v371 = vadd.s32 %v368, %v370
      %p372 = scmp.eq.s32.totalorder %s21, 0
      // Predicated region
      $region29: #{multibox_loss.3} parent=27 // pred_check
        %p373 = pneg %p372
      $region30: #{multibox_loss.3} parent=27 // pred_check_branch
        %375 = sbr.rel (%p373) target = $region32
      $region31: #{multibox_loss.3} parent=27 // pred_region
        %vm376 = vcmask 7168
        %377 = vst.msk [vmem:[#allocation2] sm:$0xff] %vm376, %v350
        %378 = vst.msk [vmem:[#allocation3] sm:$0xff] %vm376, %v371
      $region32: #{multibox_loss.3} parent=27 // pred_fallthru
        _
      %p379 = scmp.gt.s32.totalorder %s21, 0
      // Predicated region
      $region33: #{multibox_loss.3} parent=27 // pred_check
        %p380 = pneg %p379
      $region34: #{multibox_loss.3} parent=27 // pred_check_branch
        %382 = sbr.rel (%p380) target = $region36
      $region35: #{multibox_loss.3} parent=27 // pred_region
        %v383 = vld [vmem:[#allocation2] sm:$0xff]
        %vm384 = vcmp.gt.f32.partialorder %v350, %v383
        %v385 = vld [vmem:[#allocation3] sm:$0xff]
        %v386 = vsel %vm384, %v371, %v385
        %vm387 = vcmask 7168
        %388 = vst.msk [vmem:[#allocation3] sm:$0xff] %vm387, %v386
        %v389 = vld [vmem:[#allocation2] sm:$0xff]
        %v390 = vmax.f32 %v350, %v389
        %391 = vst.msk [vmem:[#allocation2] sm:$0xff] %vm387, %v390
      $region36: #{multibox_loss.3} parent=27 // pred_fallthru
        _
      // Predicated region
      $region37: #{multibox_loss.3} parent=27 // pred_check
        %p392 = pneg %p372
      $region38: #{multibox_loss.3} parent=27 // pred_check_branch
        %394 = sbr.rel (%p392) target = $region40
      $region39: #{multibox_loss.3} parent=27 // pred_region
        %v395 = vld [vmem:[#allocation3] sm:$0xff]
        %vm396 = vcmask 7168
        %397 = vst.msk [vmem:[%s254] sm:$0xff] %vm396, %v395
      $region40: #{multibox_loss.3} parent=27 // pred_fallthru
        _
      %p398 = scmp.lt.s32.totalorder %s20, 1
      %s399 = scalar_select %p398, %s20, 1
      %p400 = scmp.lt.s32.totalorder %s21, 0
      %s401 = scalar_select %p400, %s21, 0
      %s402 = sadd.s32 %s401, %s399
      %s403 = scalar_lea.vmem %s2, %s402
      %p404 = scmp.lt.s32.totalorder %s20, 1
      %s405 = scalar_select %p404, %s20, 1
      %p406 = scmp.lt.s32.totalorder %s21, 0
      %s407 = scalar_select %p406, %s21, 0
      %s408 = sadd.s32 %s407, %s405
      %s409 = scalar_lea.vmem %s3, %s408
      %p410 = scmp.lt.s32.totalorder %s20, 1
      %s411 = scalar_select %p410, %s20, 1
      %s412 = smul.addr %s411, 8
      %s413 = scalar_lea.vmem %s4, %s412
      // Predicated region
      $region41: #{multibox_loss.3} parent=27 // pred_check
        %p414 = pneg %p100
      $region42: #{multibox_loss.3} parent=27 // pred_check_branch
        %416 = sbr.rel (%p414) target = $region44
      $region43: #{multibox_loss.3} parent=27 // pred_region
        _
      $region44: #{multibox_loss.3} parent=27 // pred_fallthru
        _
      // Predicated region
      $region45: #{multibox_loss.3} parent=27 // pred_check
        %p417 = pneg %p128
      $region46: #{multibox_loss.3} parent=27 // pred_check_branch
        %419 = sbr.rel (%p417) target = $region48
      $region47: #{multibox_loss.3} parent=27 // pred_region
        _
      $region48: #{multibox_loss.3} parent=27 // pred_fallthru
        _
      // Predicated region
      $region49: #{multibox_loss.3} parent=27 // pred_check
        %p420 = pneg %p154
      $region50: #{multibox_loss.3} parent=27 // pred_check_branch
        %422 = sbr.rel (%p420) target = $region52
      $region51: #{multibox_loss.3} parent=27 // pred_region
        _
      $region52: #{multibox_loss.3} parent=27 // pred_fallthru
        _
    $region28: #{multibox_loss.3} parent=5 // pred_fallthru
      _
    %p423 = scmp.le.s32.totalorder 2, %s11
    // Predicated region
    $region53: #{multibox_loss.3} parent=5 // pred_check
      %p424 = pneg %p423
    $region54: #{multibox_loss.3} parent=5 // pred_check_branch
      %426 = sbr.rel (%p424) target = $region56
    $region55: #{multibox_loss.3} parent=5 // pred_region
      %s427 = ssub.s32 %s11, 2
      // Predicated region
      $region57: #{multibox_loss.3} parent=55 // pred_check
        %p428 = pneg %p106
      $region58: #{multibox_loss.3} parent=55 // pred_check_branch
        %430 = sbr.rel (%p428) target = $region60
      $region59: #{multibox_loss.3} parent=55 // pred_region
        %p431 = scmp.lt.s32.totalorder %s22, 1
        %s432 = scalar_select %p431, %s22, 1
        %p433 = scmp.lt.s32.totalorder %s23, 0
        %s434 = scalar_select %p433, %s23, 0
        %s435 = sadd.s32 %s434, %s432
        %s436 = scalar_lea.vmem %s2, %s435
      $region60: #{multibox_loss.3} parent=55 // pred_fallthru
        _
      // Predicated region
      $region61: #{multibox_loss.3} parent=55 // pred_check
        %p437 = pneg %p134
      $region62: #{multibox_loss.3} parent=55 // pred_check_branch
        %439 = sbr.rel (%p437) target = $region64
      $region63: #{multibox_loss.3} parent=55 // pred_region
        %p440 = scmp.lt.s32.totalorder %s22, 1
        %s441 = scalar_select %p440, %s22, 1
        %p442 = scmp.lt.s32.totalorder %s23, 0
        %s443 = scalar_select %p442, %s23, 0
        %s444 = sadd.s32 %s443, %s441
        %s445 = scalar_lea.vmem %s3, %s444
      $region64: #{multibox_loss.3} parent=55 // pred_fallthru
        _
      // Predicated region
      $region65: #{multibox_loss.3} parent=55 // pred_check
        %p446 = pneg %p160
      $region66: #{multibox_loss.3} parent=55 // pred_check_branch
        %448 = sbr.rel (%p446) target = $region68
      $region67: #{multibox_loss.3} parent=55 // pred_region
        %p449 = scmp.lt.s32.totalorder %s22, 1
        %s450 = scalar_select %p449, %s22, 1
        %s451 = smul.addr %s450, 8
        %s452 = scalar_lea.vmem %s4, %s451
      $region68: #{multibox_loss.3} parent=55 // pred_fallthru
        _
    $region56: #{multibox_loss.3} parent=5 // pred_fallthru
      _
  $region6: #{multibox_loss.3} parent=0 // loop_footer
    %s15 = sadd.s32 1, %s11
  $region7: #{multibox_loss.3} parent=0 // loop_footer_branch
    %10 = sbr.rel target = $region3
  $region8: #{multibox_loss.3} parent=0 // loop_exit
    _

// kernel: multibox_loss.5
$region0: #{multibox_loss.5}
  #allocation0 [shape = 'u32[]', space=smem, size = 0x4, offset = 0x4, fixed_abs, tag = 'smem constant byte address 0x4 - core index']
  #allocation1 [shape = 'u32[144,128]{1,0:T(1,128)}', space=vmem, size = 0x12000, scoped, tag = 'internal scratch']
  %s0 = inlined_call_operand.vmem [shape: f32[2,3,128], index: 0, kind: input, shape index: {}]
  %s1 = inlined_call_operand.vmem [shape: s32[2,2,128], index: 1, kind: input, shape index: {}]
  %s2 = inlined_call_operand.vmem [shape: f32[2,1,128], index: 2, kind: input, shape index: {}]
  %s3 = inlined_call_operand.vmem [shape: f32[2,4,128], index: 3, kind: input, shape index: {}]
  %s4 = inlined_call_operand.vmem [shape: f32[2,8,8], index: 4, kind: input, shape index: {}]
  %s5 = inlined_call_operand.vmem [shape: f32[8,128], index: 5, kind: input, shape index: {}]
  %s6 = inlined_call_operand.vmem [shape: f32[2,1,1], index: 6, kind: output, shape index: {0}]
  %s7 = inlined_call_operand.vmem [shape: f32[2,1,1], index: 7, kind: output, shape index: {1}]
  %s8 = inlined_call_operand.vmem [shape: f32[2,1,1], index: 8, kind: output, shape index: {2}]
  %s9 = inlined_call_operand.vmem [shape: f32[2,1,1], index: 9, kind: output, shape index: {3}]
  %10 = xla_tuple %s6, %s7, %s8, %s9
  %s11 = sld [smem:[#allocation0]]
  $region85: #{multibox_loss.5} parent=0
    _
  %s13 = ssub.s32 1, %s11
  %s14 = scalar_select 0, %s13, %s11
  loop: start=0, step=1, limit=4
  $region2: #{multibox_loss.5} parent=0 // loop_pre_header
    _
  $region3: #{multibox_loss.5} parent=0 // loop_header
    %s16 = sphi 0, %s20
    %p17 = scmp.ge.s32.totalorder %s16, 4
    %s23 = sphi 0, %s35
    %s24 = sphi 0, %s31
    %s25 = sphi 0, %s23
    %s26 = sphi 0, %s24
    %s27 = sphi 0, %s25
    %s28 = sphi 0, %s26
    %s40 = sphi 0, %s42
    %s43 = sphi 0, %s40
    %s44 = sphi 0, %s43
    %s60 = sphi 0, %s44
    %s68 = sphi 0, %s70
    %s71 = sphi 0, %s68
    %s72 = sphi 0, %s71
    %s88 = sphi 0, %s72
    %s96 = sphi 0, %s98
    %s99 = sphi 0, %s96
    %s100 = sphi 0, %s99
    %s116 = sphi 0, %s100
    %s124 = sphi 0, %s126
    %s127 = sphi 0, %s124
    %s128 = sphi 0, %s127
    %s144 = sphi 0, %s128
    %s150 = sphi 0, %s152
    %s153 = sphi 0, %s150
    %s154 = sphi 0, %s153
    %s170 = sphi 0, %s154
    %s176 = sphi 0, %s178
    %s179 = sphi 0, %s176
    %s180 = sphi 0, %s179
    %s196 = sphi 0, %s180
    %s202 = sphi 0, %s204
    %s205 = sphi 0, %s202
    %s206 = sphi 0, %s205
    %s222 = sphi 0, %s206
    %s228 = sphi 0, %s230
    %s231 = sphi 0, %s228
    %s232 = sphi 0, %s231
    %s248 = sphi 0, %s232
    %s254 = sphi 0, %s256
    %s257 = sphi 0, %s254
    %s258 = sphi 0, %s257
    %s274 = sphi 0, %s258
    %s280 = sphi 0, %s282
    %s283 = sphi 0, %s280
    %s284 = sphi 0, %s283
    %s300 = sphi 0, %s284
  $region4: #{multibox_loss.5} parent=0 // loop_header_branch
    %19 = sbr.rel (%p17) target = $region8
  $region5: #{multibox_loss.5} parent=0 // loop_body
    %s21 = ssub.s32 %s16, 1
    %s22 = ssub.s32 %s16, 2
    %s29 = sadd.s32 1, %s24
    %p30 = scmp.ge.s32.totalorder %s29, 1
    %s31 = scalar_select %p30, 0, %s29
    %s32 = sadd.s32 1, %s23
    %s33 = scalar_select %p30, %s32, %s23
    %p34 = scmp.ge.s32.totalorder %s33, 2
    %s35 = scalar_select %p34, 0, %s33
    %s36 = ssub.s32 %s23, %s35
    %s37 = ssub.s32 %s24, %s31
    %s38 = sor.u32 %s36, %s37
    %p39 = scmp.eq.s32.totalorder %s38, 0
    %s41 = sadd.s32 %s40, 1
    %s42 = scalar_select %p39, %s40, %s41
    %p45 = pneg %p39
    %p46 = scmp.eq.s32.totalorder %s16, 1
    %p47 = por %p45, %p46
    %p48 = scmp.ne.s32.totalorder %s40, %s43
    %p49 = scmp.eq.s32.totalorder %s16, 0
    %p50 = por %p48, %p49
    %p51 = scmp.ne.s32.totalorder %s40, %s43
    %p52 = scmp.eq.s32.totalorder %s21, 1
    %p53 = por %p51, %p52
    %p54 = scmp.ne.s32.totalorder %s43, %s44
    %p55 = scmp.eq.s32.totalorder %s21, 0
    %p56 = por %p54, %p55
    %p57 = scmp.ne.s32.totalorder %s43, %s44
    %p58 = scmp.eq.s32.totalorder %s22, 1
    %p59 = por %p57, %p58
    %p61 = scmp.ne.s32.totalorder %s44, %s60
    %p62 = scmp.eq.s32.totalorder %s22, 0
    %p63 = por %p61, %p62
    %s64 = ssub.s32 %s23, %s35
    %s65 = ssub.s32 %s24, %s31
    %s66 = sor.u32 %s64, %s65
    %p67 = scmp.eq.s32.totalorder %s66, 0
    %s69 = sadd.s32 %s68, 1
    %s70 = scalar_select %p67, %s68, %s69
    %p73 = pneg %p67
    %p74 = scmp.eq.s32.totalorder %s16, 1
    %p75 = por %p73, %p74
    %p76 = scmp.ne.s32.totalorder %s68, %s71
    %p77 = scmp.eq.s32.totalorder %s16, 0
    %p78 = por %p76, %p77
    %p79 = scmp.ne.s32.totalorder %s68, %s71
    %p80 = scmp.eq.s32.totalorder %s21, 1
    %p81 = por %p79, %p80
    %p82 = scmp.ne.s32.totalorder %s71, %s72
    %p83 = scmp.eq.s32.totalorder %s21, 0
    %p84 = por %p82, %p83
    %p85 = scmp.ne.s32.totalorder %s71, %s72
    %p86 = scmp.eq.s32.totalorder %s22, 1
    %p87 = por %p85, %p86
    %p89 = scmp.ne.s32.totalorder %s72, %s88
    %p90 = scmp.eq.s32.totalorder %s22, 0
    %p91 = por %p89, %p90
    %s92 = ssub.s32 %s23, %s35
    %s93 = ssub.s32 %s24, %s31
    %s94 = sor.u32 %s92, %s93
    %p95 = scmp.eq.s32.totalorder %s94, 0
    %s97 = sadd.s32 %s96, 1
    %s98 = scalar_select %p95, %s96, %s97
    %p101 = pneg %p95
    %p102 = scmp.eq.s32.totalorder %s16, 1
    %p103 = por %p101, %p102
    %p104 = scmp.ne.s32.totalorder %s96, %s99
    %p105 = scmp.eq.s32.totalorder %s16, 0
    %p106 = por %p104, %p105
    %p107 = scmp.ne.s32.totalorder %s96, %s99
    %p108 = scmp.eq.s32.totalorder %s21, 1
    %p109 = por %p107, %p108
    %p110 = scmp.ne.s32.totalorder %s99, %s100
    %p111 = scmp.eq.s32.totalorder %s21, 0
    %p112 = por %p110, %p111
    %p113 = scmp.ne.s32.totalorder %s99, %s100
    %p114 = scmp.eq.s32.totalorder %s22, 1
    %p115 = por %p113, %p114
    %p117 = scmp.ne.s32.totalorder %s100, %s116
    %p118 = scmp.eq.s32.totalorder %s22, 0
    %p119 = por %p117, %p118
    %s120 = ssub.s32 %s23, %s35
    %s121 = ssub.s32 %s24, %s31
    %s122 = sor.u32 %s120, %s121
    %p123 = scmp.eq.s32.totalorder %s122, 0
    %s125 = sadd.s32 %s124, 1
    %s126 = scalar_select %p123, %s124, %s125
    %p129 = pneg %p123
    %p130 = scmp.eq.s32.totalorder %s16, 1
    %p131 = por %p129, %p130
    %p132 = scmp.ne.s32.totalorder %s124, %s127
    %p133 = scmp.eq.s32.totalorder %s16, 0
    %p134 = por %p132, %p133
    %p135 = scmp.ne.s32.totalorder %s124, %s127
    %p136 = scmp.eq.s32.totalorder %s21, 1
    %p137 = por %p135, %p136
    %p138 = scmp.ne.s32.totalorder %s127, %s128
    %p139 = scmp.eq.s32.totalorder %s21, 0
    %p140 = por %p138, %p139
    %p141 = scmp.ne.s32.totalorder %s127, %s128
    %p142 = scmp.eq.s32.totalorder %s22, 1
    %p143 = por %p141, %p142
    %p145 = scmp.ne.s32.totalorder %s128, %s144
    %p146 = scmp.eq.s32.totalorder %s22, 0
    %p147 = por %p145, %p146
    %s148 = ssub.s32 %s23, %s35
    %p149 = scmp.eq.s32.totalorder %s148, 0
    %s151 = sadd.s32 %s150, 1
    %s152 = scalar_select %p149, %s150, %s151
    %p155 = pneg %p149
    %p156 = scmp.eq.s32.totalorder %s16, 1
    %p157 = por %p155, %p156
    %p158 = scmp.ne.s32.totalorder %s150, %s153
    %p159 = scmp.eq.s32.totalorder %s16, 0
    %p160 = por %p158, %p159
    %p161 = scmp.ne.s32.totalorder %s150, %s153
    %p162 = scmp.eq.s32.totalorder %s21, 1
    %p163 = por %p161, %p162
    %p164 = scmp.ne.s32.totalorder %s153, %s154
    %p165 = scmp.eq.s32.totalorder %s21, 0
    %p166 = por %p164, %p165
    %p167 = scmp.ne.s32.totalorder %s153, %s154
    %p168 = scmp.eq.s32.totalorder %s22, 1
    %p169 = por %p167, %p168
    %p171 = scmp.ne.s32.totalorder %s154, %s170
    %p172 = scmp.eq.s32.totalorder %s22, 0
    %p173 = por %p171, %p172
    %s174 = ssub.s32 %s24, %s31
    %p175 = scmp.eq.s32.totalorder %s174, 0
    %s177 = sadd.s32 %s176, 1
    %s178 = scalar_select %p175, %s176, %s177
    %p181 = pneg %p175
    %p182 = scmp.eq.s32.totalorder %s16, 1
    %p183 = por %p181, %p182
    %p184 = scmp.ne.s32.totalorder %s176, %s179
    %p185 = scmp.eq.s32.totalorder %s16, 0
    %p186 = por %p184, %p185
    %p187 = scmp.ne.s32.totalorder %s176, %s179
    %p188 = scmp.eq.s32.totalorder %s21, 1
    %p189 = por %p187, %p188
    %p190 = scmp.ne.s32.totalorder %s179, %s180
    %p191 = scmp.eq.s32.totalorder %s21, 0
    %p192 = por %p190, %p191
    %p193 = scmp.ne.s32.totalorder %s179, %s180
    %p194 = scmp.eq.s32.totalorder %s22, 1
    %p195 = por %p193, %p194
    %p197 = scmp.ne.s32.totalorder %s180, %s196
    %p198 = scmp.eq.s32.totalorder %s22, 0
    %p199 = por %p197, %p198
    %s200 = ssub.s32 %s23, %s35
    %p201 = scmp.eq.s32.totalorder %s200, 0
    %s203 = sadd.s32 %s202, 1
    %s204 = scalar_select %p201, %s202, %s203
    %p207 = pneg %p201
    %p208 = scmp.eq.s32.totalorder %s16, 1
    %p209 = por %p207, %p208
    %p210 = scmp.ne.s32.totalorder %s202, %s205
    %p211 = scmp.eq.s32.totalorder %s16, 0
    %p212 = por %p210, %p211
    %p213 = scmp.ne.s32.totalorder %s202, %s205
    %p214 = scmp.eq.s32.totalorder %s21, 1
    %p215 = por %p213, %p214
    %p216 = scmp.ne.s32.totalorder %s205, %s206
    %p217 = scmp.eq.s32.totalorder %s21, 0
    %p218 = por %p216, %p217
    %p219 = scmp.ne.s32.totalorder %s205, %s206
    %p220 = scmp.eq.s32.totalorder %s22, 1
    %p221 = por %p219, %p220
    %p223 = scmp.ne.s32.totalorder %s206, %s222
    %p224 = scmp.eq.s32.totalorder %s22, 0
    %p225 = por %p223, %p224
    %s226 = ssub.s32 %s23, %s35
    %p227 = scmp.eq.s32.totalorder %s226, 0
    %s229 = sadd.s32 %s228, 1
    %s230 = scalar_select %p227, %s228, %s229
    %p233 = pneg %p227
    %p234 = scmp.eq.s32.totalorder %s16, 1
    %p235 = por %p233, %p234
    %p236 = scmp.ne.s32.totalorder %s228, %s231
    %p237 = scmp.eq.s32.totalorder %s16, 0
    %p238 = por %p236, %p237
    %p239 = scmp.ne.s32.totalorder %s228, %s231
    %p240 = scmp.eq.s32.totalorder %s21, 1
    %p241 = por %p239, %p240
    %p242 = scmp.ne.s32.totalorder %s231, %s232
    %p243 = scmp.eq.s32.totalorder %s21, 0
    %p244 = por %p242, %p243
    %p245 = scmp.ne.s32.totalorder %s231, %s232
    %p246 = scmp.eq.s32.totalorder %s22, 1
    %p247 = por %p245, %p246
    %p249 = scmp.ne.s32.totalorder %s232, %s248
    %p250 = scmp.eq.s32.totalorder %s22, 0
    %p251 = por %p249, %p250
    %s252 = ssub.s32 %s23, %s35
    %p253 = scmp.eq.s32.totalorder %s252, 0
    %s255 = sadd.s32 %s254, 1
    %s256 = scalar_select %p253, %s254, %s255
    %p259 = pneg %p253
    %p260 = scmp.eq.s32.totalorder %s16, 1
    %p261 = por %p259, %p260
    %p262 = scmp.ne.s32.totalorder %s254, %s257
    %p263 = scmp.eq.s32.totalorder %s16, 0
    %p264 = por %p262, %p263
    %p265 = scmp.ne.s32.totalorder %s254, %s257
    %p266 = scmp.eq.s32.totalorder %s21, 1
    %p267 = por %p265, %p266
    %p268 = scmp.ne.s32.totalorder %s257, %s258
    %p269 = scmp.eq.s32.totalorder %s21, 0
    %p270 = por %p268, %p269
    %p271 = scmp.ne.s32.totalorder %s257, %s258
    %p272 = scmp.eq.s32.totalorder %s22, 1
    %p273 = por %p271, %p272
    %p275 = scmp.ne.s32.totalorder %s258, %s274
    %p276 = scmp.eq.s32.totalorder %s22, 0
    %p277 = por %p275, %p276
    %s278 = ssub.s32 %s23, %s35
    %p279 = scmp.eq.s32.totalorder %s278, 0
    %s281 = sadd.s32 %s280, 1
    %s282 = scalar_select %p279, %s280, %s281
    %p285 = pneg %p279
    %p286 = scmp.eq.s32.totalorder %s16, 1
    %p287 = por %p285, %p286
    %p288 = scmp.ne.s32.totalorder %s280, %s283
    %p289 = scmp.eq.s32.totalorder %s16, 0
    %p290 = por %p288, %p289
    %p291 = scmp.ne.s32.totalorder %s280, %s283
    %p292 = scmp.eq.s32.totalorder %s21, 1
    %p293 = por %p291, %p292
    %p294 = scmp.ne.s32.totalorder %s283, %s284
    %p295 = scmp.eq.s32.totalorder %s21, 0
    %p296 = por %p294, %p295
    %p297 = scmp.ne.s32.totalorder %s283, %s284
    %p298 = scmp.eq.s32.totalorder %s22, 1
    %p299 = por %p297, %p298
    %p301 = scmp.ne.s32.totalorder %s284, %s300
    %p302 = scmp.eq.s32.totalorder %s22, 0
    %p303 = por %p301, %p302
    %p304 = scmp.le.s32.totalorder 1, %s16
    %p305 = scmp.lt.s32.totalorder %s16, 3
    %p306 = pnand %p304, %p305
    %p307 = pneg %p306
    // Predicated region
    $region9: #{multibox_loss.5} parent=5 // pred_check
      _
    $region10: #{multibox_loss.5} parent=5 // pred_check_branch
      %309 = sbr.rel (%p306) target = $region12
    $region11: #{multibox_loss.5} parent=5 // pred_region
      %s310 = ssub.s32 %s16, 1
      // Predicated region
      $region13: #{multibox_loss.5} parent=11 // pred_check
        %p311 = pneg %p192
      $region14: #{multibox_loss.5} parent=11 // pred_check_branch
        %313 = sbr.rel (%p311) target = $region16
      $region15: #{multibox_loss.5} parent=11 // pred_region
        %p314 = scmp.lt.s32.totalorder %s26, 0
        %s315 = scalar_select %p314, %s26, 0
        %s316 = smul.addr %s315, 8
        %s317 = scalar_lea.vmem %s5, %s316
      $region16: #{multibox_loss.5} parent=11 // pred_fallthru
        _
    $region12: #{multibox_loss.5} parent=5 // pred_fallthru
      _
    %p318 = scmp.lt.s32.totalorder %s16, 2
    // Predicated region
    $region17: #{multibox_loss.5} parent=5 // pred_check
      %p319 = pneg %p318
    $region18: #{multibox_loss.5} parent=5 // pred_check_branch
      %321 = sbr.rel (%p319) target = $region20
    $region19: #{multibox_loss.5} parent=5 // pred_region
      // Predicated region
      $region21: #{multibox_loss.5} parent=19 // pred_check
        %p322 = pneg %p50
      $region22: #{multibox_loss.5} parent=19 // pred_check_branch
        %324 = sbr.rel (%p322) target = $region24
      $region23: #{multibox_loss.5} parent=19 // pred_region
        %p325 = scmp.lt.s32.totalorder %s23, 1
        %s326 = scalar_select %p325, %s23, 1
        %p327 = scmp.lt.s32.totalorder %s24, 0
        %s328 = scalar_select %p327, %s24, 0
        %s329 = sadd.s32 %s328, %s326
        %s330 = smul.addr %s329, 4
        %s331 = scalar_lea.vmem %s0, %s330
      $region24: #{multibox_loss.5} parent=19 // pred_fallthru
        _
      // Predicated region
      $region25: #{multibox_loss.5} parent=19 // pred_check
        %p332 = pneg %p78
      $region26: #{multibox_loss.5} parent=19 // pred_check_branch
        %334 = sbr.rel (%p332) target = $region28
      $region27: #{multibox_loss.5} parent=19 // pred_region
        %p335 = scmp.lt.s32.totalorder %s23, 1
        %s336 = scalar_select %p335, %s23, 1
        %p337 = scmp.lt.s32.totalorder %s24, 0
        %s338 = scalar_select %p337, %s24, 0
        %s339 = sadd.s32 %s338, %s336
        %s340 = smul.addr %s339, 2
        %s341 = scalar_lea.vmem %s1, %s340
      $region28: #{multibox_loss.5} parent=19 // pred_fallthru
        _
      // Predicated region
      $region29: #{multibox_loss.5} parent=19 // pred_check
        %p342 = pneg %p106
      $region30: #{multibox_loss.5} parent=19 // pred_check_branch
        %344 = sbr.rel (%p342) target = $region32
      $region31: #{multibox_loss.5} parent=19 // pred_region
        %p345 = scmp.lt.s32.totalorder %s23, 1
        %s346 = scalar_select %p345, %s23, 1
        %p347 = scmp.lt.s32.totalorder %s24, 0
        %s348 = scalar_select %p347, %s24, 0
        %s349 = sadd.s32 %s348, %s346
        %s350 = scalar_lea.vmem %s2, %s349
      $region32: #{multibox_loss.5} parent=19 // pred_fallthru
        _
      // Predicated region
      $region33: #{multibox_loss.5} parent=19 // pred_check
        %p351 = pneg %p134
      $region34: #{multibox_loss.5} parent=19 // pred_check_branch
        %353 = sbr.rel (%p351) target = $region36
      $region35: #{multibox_loss.5} parent=19 // pred_region
        %p354 = scmp.lt.s32.totalorder %s23, 1
        %s355 = scalar_select %p354, %s23, 1
        %p356 = scmp.lt.s32.totalorder %s24, 0
        %s357 = scalar_select %p356, %s24, 0
        %s358 = sadd.s32 %s357, %s355
        %s359 = smul.addr %s358, 4
        %s360 = scalar_lea.vmem %s3, %s359
      $region36: #{multibox_loss.5} parent=19 // pred_fallthru
        _
      // Predicated region
      $region37: #{multibox_loss.5} parent=19 // pred_check
        %p361 = pneg %p160
      $region38: #{multibox_loss.5} parent=19 // pred_check_branch
        %363 = sbr.rel (%p361) target = $region40
      $region39: #{multibox_loss.5} parent=19 // pred_region
        %p364 = scmp.lt.s32.totalorder %s23, 1
        %s365 = scalar_select %p364, %s23, 1
        %s366 = smul.addr %s365, 8
        %s367 = scalar_lea.vmem %s4, %s366
      $region40: #{multibox_loss.5} parent=19 // pred_fallthru
        _
    $region20: #{multibox_loss.5} parent=5 // pred_fallthru
      _
    %p368 = scmp.le.s32.totalorder 1, %s16
    %p369 = scmp.lt.s32.totalorder %s16, 3
    %p370 = pnand %p368, %p369
    %p371 = pneg %p370
    // Predicated region
    $region41: #{multibox_loss.5} parent=5 // pred_check
      _
    $region42: #{multibox_loss.5} parent=5 // pred_check_branch
      %373 = sbr.rel (%p370) target = $region44
    $region43: #{multibox_loss.5} parent=5 // pred_region
      %s374 = ssub.s32 %s16, 1
      %p375 = scmp.lt.s32.totalorder %s25, 1
      %s376 = scalar_select %p375, %s25, 1
      %p377 = scmp.lt.s32.totalorder %s26, 0
      %s378 = scalar_select %p377, %s26, 0
      %s379 = sadd.s32 %s378, %s376
      %s380 = smul.addr %s379, 4
      %s381 = scalar_lea.vmem %s0, %s380
      %p382 = pneg %p56
      %p383 = pneg %p53
      %p384 = scmp.lt.s32.totalorder %s25, 1
      %s385 = scalar_select %p384, %s25, 1
      %p386 = scmp.lt.s32.totalorder %s26, 0
      %s387 = scalar_select %p386, %s26, 0
      %s388 = sadd.s32 %s387, %s385
      %s389 = smul.addr %s388, 2
      %s390 = scalar_lea.vmem %s1, %s389
      %p391 = pneg %p84
      %p392 = pneg %p81
      %p393 = scmp.lt.s32.totalorder %s25, 1
      %s394 = scalar_select %p393, %s25, 1
      %p395 = scmp.lt.s32.totalorder %s26, 0
      %s396 = scalar_select %p395, %s26, 0
      %s397 = sadd.s32 %s396, %s394
      %s398 = scalar_lea.vmem %s2, %s397
      %p399 = pneg %p112
      %p400 = pneg %p109
      %p401 = scmp.lt.s32.totalorder %s25, 1
      %s402 = scalar_select %p401, %s25, 1
      %p403 = scmp.lt.s32.totalorder %s26, 0
      %s404 = scalar_select %p403, %s26, 0
      %s405 = sadd.s32 %s404, %s402
      %s406 = smul.addr %s405, 4
      %s407 = scalar_lea.vmem %s3, %s406
      %p408 = pneg %p140
      %p409 = pneg %p137
      %p410 = scmp.lt.s32.totalorder %s25, 1
      %s411 = scalar_select %p410, %s25, 1
      %s412 = smul.addr %s411, 8
      %s413 = scalar_lea.vmem %s4, %s412
      %p414 = pneg %p166
      %p415 = pneg %p163
      %p416 = scmp.lt.s32.totalorder %s26, 0
      %s417 = scalar_select %p416, %s26, 0
      %s418 = smul.addr %s417, 8
      %s419 = scalar_lea.vmem %s5, %s418
      %p420 = pneg %p192
      %p421 = pneg %p189
      %p422 = pneg %p218
      %p423 = pneg %p215
      %p424 = scmp.lt.s32.totalorder %s25, 1
      %s425 = scalar_select %p424, %s25, 1
      %s426 = scalar_lea.vmem %s6, %s425
      %p427 = pneg %p244
      %p428 = pneg %p241
      %p429 = scmp.lt.s32.totalorder %s25, 1
      %s430 = scalar_select %p429, %s25, 1
      %s431 = scalar_lea.vmem %s7, %s430
      %p432 = pneg %p270
      %p433 = pneg %p267
      %p434 = scmp.lt.s32.totalorder %s25, 1
      %s435 = scalar_select %p434, %s25, 1
      %s436 = scalar_lea.vmem %s8, %s435
      %p437 = pneg %p296
      %p438 = pneg %p293
      %p439 = scmp.lt.s32.totalorder %s25, 1
      %s440 = scalar_select %p439, %s25, 1
      %s441 = scalar_lea.vmem %s9, %s440
      %p442 = scmp.lt.s32.totalorder %s25, 1
      %s443 = scalar_select %p442, %s25, 1
      %p444 = scmp.lt.s32.totalorder %s26, 0
      %s445 = scalar_select %p444, %s26, 0
      %s446 = sadd.s32 %s445, %s443
      %s447 = smul.addr %s446, 4
      %s448 = scalar_lea.vmem %s0, %s447
      %p449 = scmp.lt.s32.totalorder %s25, 1
      %s450 = scalar_select %p449, %s25, 1
      %p451 = scmp.lt.s32.totalorder %s26, 0
      %s452 = scalar_select %p451, %s26, 0
      %s453 = sadd.s32 %s452, %s450
      %s454 = smul.addr %s453, 2
      %s455 = scalar_lea.vmem %s1, %s454
      %p456 = scmp.lt.s32.totalorder %s25, 1
      %s457 = scalar_select %p456, %s25, 1
      %p458 = scmp.lt.s32.totalorder %s26, 0
      %s459 = scalar_select %p458, %s26, 0
      %s460 = sadd.s32 %s459, %s457
      %s461 = scalar_lea.vmem %s2, %s460
      %p462 = scmp.lt.s32.totalorder %s25, 1
      %s463 = scalar_select %p462, %s25, 1
      %p464 = scmp.lt.s32.totalorder %s26, 0
      %s465 = scalar_select %p464, %s26, 0
      %s466 = sadd.s32 %s465, %s463
      %s467 = smul.addr %s466, 4
      %s468 = scalar_lea.vmem %s3, %s467
      %p469 = scmp.lt.s32.totalorder %s25, 1
      %s470 = scalar_select %p469, %s25, 1
      %s471 = smul.addr %s470, 8
      %s472 = scalar_lea.vmem %s4, %s471
      %p473 = scmp.lt.s32.totalorder %s26, 0
      %s474 = scalar_select %p473, %s26, 0
      %s475 = smul.addr %s474, 8
      %s476 = scalar_lea.vmem %s5, %s475
      %p477 = scmp.lt.s32.totalorder %s25, 1
      %s478 = scalar_select %p477, %s25, 1
      %s479 = scalar_lea.vmem %s6, %s478
      %p480 = scmp.lt.s32.totalorder %s25, 1
      %s481 = scalar_select %p480, %s25, 1
      %s482 = scalar_lea.vmem %s7, %s481
      %p483 = scmp.lt.s32.totalorder %s25, 1
      %s484 = scalar_select %p483, %s25, 1
      %s485 = scalar_lea.vmem %s8, %s484
      %p486 = scmp.lt.s32.totalorder %s25, 1
      %s487 = scalar_select %p486, %s25, 1
      %s488 = scalar_lea.vmem %s9, %s487
      %v489 = vld [vmem:[%s455] sm:$0x1]
      %v490 = vld [vmem:[%s455 + $0x1] sm:$0x1]
      %vm491 = vcmp.gt.s32.totalorder %v489, 0
      %v492 = vsel %vm491, 1, 0
      %v493 = vcvt.s32.f32 %v492
      %v494 = vld [vmem:[%s461] sm:$0x1]
      %v495 = vld [vmem:[%s448 + $0x1] sm:$0x1]
      %v496 = vmul.f32 %v493, %v495
      %v497 = vld [vmem:[%s448 + $0x2] sm:$0x1]
      %v498 = vmul.f32 %v494, %v497
      %v499 = vadd.f32 %v496, %v498
      %vm500 = vcmask 1040384
      %v501 = vsel %vm500, %v499, 0.0
      %502 = vadd.xlane.f32.xlu0 %v501
      %v503 = vpop.xlane.xlu0 %502
      %v504 = vsel %vm500, %v493, 0.0
      %505 = vadd.xlane.f32.xlu0 %v504
      %v506 = vpop.xlane.xlu0 %505
      %vm507 = vcmp.eq.s32.totalorder %v490, 0
      %v508 = vld [vmem:[%s472] sm:$0xff]
      %v509 = vsel %vm507, 1, 0
      %v510 = vlaneseq
      %v511 = vshrl.u32 %v510, 7
      %v512 = vsub.s32 0, %v511
      %v513 = vrot.slane %v509, %v512
      %vm514 = vcmp.eq.s32.totalorder %v513, 1
      %516 = vset.pattern.permute.xlu0 0
      %517 = vperm.xlu0 %516, %v508
      %v518 = vpop.permute.xlu0 %517
      %v520 = vsel %vm514, %v518, 0.0
      %vm521 = vcmp.eq.s32.totalorder %v490, 1
      %v522 = vsel %vm521, 1, 0
      %v523 = vlaneseq
      %v524 = vshrl.u32 %v523, 7
      %v525 = vsub.s32 0, %v524
      %v526 = vrot.slane %v522, %v525
      %vm527 = vcmp.eq.s32.totalorder %v526, 1
      %528 = vset.pattern.permute.xlu0 1
      %529 = vperm.xlu0 %528, %v508
      %v530 = vpop.permute.xlu0 %529
      %v532 = vsel %vm527, %v530, %v520
      %vm533 = vcmp.eq.s32.totalorder %v490, 2
      %v534 = vsel %vm533, 1, 0
      %v535 = vlaneseq
      %v536 = vshrl.u32 %v535, 7
      %v537 = vsub.s32 0, %v536
      %v538 = vrot.slane %v534, %v537
      %vm539 = vcmp.eq.s32.totalorder %v538, 1
      %540 = vset.pattern.permute.xlu0 2
      %541 = vperm.xlu0 %540, %v508
      %v542 = vpop.permute.xlu0 %541
      %v544 = vsel %vm539, %v542, %v532
      %vm545 = vcmp.eq.s32.totalorder %v490, 3
      %v546 = vsel %vm545, 1, 0
      %v547 = vlaneseq
      %v548 = vshrl.u32 %v547, 7
      %v549 = vsub.s32 0, %v548
      %v550 = vrot.slane %v546, %v549
      %vm551 = vcmp.eq.s32.totalorder %v550, 1
      %552 = vset.pattern.permute.xlu0 3
      %553 = vperm.xlu0 %552, %v508
      %v554 = vpop.permute.xlu0 %553
      %v556 = vsel %vm551, %v554, %v544
      %vm557 = vcmp.eq.s32.totalorder %v490, 4
      %v558 = vsel %vm557, 1, 0
      %v559 = vlaneseq
      %v560 = vshrl.u32 %v559, 7
      %v561 = vsub.s32 0, %v560
      %v562 = vrot.slane %v558, %v561
      %vm563 = vcmp.eq.s32.totalorder %v562, 1
      %564 = vset.pattern.permute.xlu0 4
      %565 = vperm.xlu0 %564, %v508
      %v566 = vpop.permute.xlu0 %565
      %v568 = vsel %vm563, %v566, %v556
      %vm569 = vcmp.eq.s32.totalorder %v490, 5
      %v570 = vsel %vm569, 1, 0
      %v571 = vlaneseq
      %v572 = vshrl.u32 %v571, 7
      %v573 = vsub.s32 0, %v572
      %v574 = vrot.slane %v570, %v573
      %vm575 = vcmp.eq.s32.totalorder %v574, 1
      %576 = vset.pattern.permute.xlu0 5
      %577 = vperm.xlu0 %576, %v508
      %v578 = vpop.permute.xlu0 %577
      %v580 = vsel %vm575, %v578, %v568
      %vm581 = vcmp.eq.s32.totalorder %v490, 6
      %v582 = vsel %vm581, 1, 0
      %v583 = vlaneseq
      %v584 = vshrl.u32 %v583, 7
      %v585 = vsub.s32 0, %v584
      %v586 = vrot.slane %v582, %v585
      %vm587 = vcmp.eq.s32.totalorder %v586, 1
      %588 = vset.pattern.permute.xlu0 6
      %589 = vperm.xlu0 %588, %v508
      %v590 = vpop.permute.xlu0 %589
      %v592 = vsel %vm587, %v590, %v580
      %vm593 = vcmp.eq.s32.totalorder %v490, 7
      %v594 = vsel %vm593, 1, 0
      %v595 = vlaneseq
      %v596 = vshrl.u32 %v595, 7
      %v597 = vsub.s32 0, %v596
      %v598 = vrot.slane %v594, %v597
      %vm599 = vcmp.eq.s32.totalorder %v598, 1
      %600 = vset.pattern.permute.xlu0 7
      %601 = vperm.xlu0 %600, %v508
      %v602 = vpop.permute.xlu0 %601
      %v604 = vsel %vm599, %v602, %v592
      %v605 = vld [vmem:[%s476] sm:$0xff]
      %v606 = vsub.f32 %v604, %v605
      %v608 = vrot.slane %v605, 4
      %v610 = vmul.f32 %v606, %v608
      %v611 = vld [vmem:[%s468] sm:$0xf]
      %v612 = vsub.f32 %v610, %v611
      %v613 = vand.u32 2147483647, %v612
      %vm614 = vcmp.lt.f32.partialorder %v613, 1.0
      %v615 = vmul.f32 %v612, 0.5
      %v616 = vmul.f32 %v615, %v612
      %v617 = vsub.f32 %v613, 0.5
      %v618 = vsel %vm614, %v616, %v617
      %vm619 = vcmp.gt.f32.partialorder %v604, 0.5
      %v620 = vlaneseq
      %v621 = vshrl.u32 %v620, 7
      %v622 = vsub.s32 0, %v621
      %v623 = vrot.slane %v492, %v622
      %vm624 = vcmp.eq.s32.totalorder %v623, 1
      %vm625 = vmand %vm624, %vm619
      %v627 = vrot.slane %v618, 4
      %v629 = vsel %vm625, %v627, 0.0
      %vm630 = vcmask 1047556
      %v631 = vsel %vm630, %v629, 0.0
      %632 = vadd.xlane.f32.xlu0 %v631
      %v633 = vpop.xlane.xlu0 %632
      %v635 = vrot.slane %v633, 4
      %vm637 = vcmask 1043456
      %v638 = vsel %vm637, %v635, 0.0
      %v639 = vrot.slane %v638, 4
      %v640 = vadd.f32 %v638, %v639
      %v641 = vrot.slane %v640, 2
      %v642 = vadd.f32 %v640, %v641
      %v643 = vrot.slane %v642, 1
      %v644 = vadd.f32 %v642, %v643
      %v645 = vsel %vm625, 1, 0
      %v646 = vcvt.s32.f32 %v645
      %v647 = vsel %vm630, %v646, 0.0
      %648 = vadd.xlane.f32.xlu0 %v647
      %v649 = vpop.xlane.xlu0 %648
      %v651 = vrot.slane %v649, 4
      %v653 = vsel %vm637, %v651, 0.0
      %v654 = vrot.slane %v653, 4
      %v655 = vadd.f32 %v653, %v654
      %v656 = vrot.slane %v655, 2
      %v657 = vadd.f32 %v655, %v656
      %v658 = vrot.slane %v657, 1
      %v659 = vadd.f32 %v657, %v658
      %p660 = scmp.eq.s32.totalorder %s26, 0
      // Predicated region
      $region45: #{multibox_loss.5} parent=43 // pred_check
        %p661 = pneg %p660
      $region46: #{multibox_loss.5} parent=43 // pred_check_branch
        %663 = sbr.rel (%p661) target = $region48
      $region47: #{multibox_loss.5} parent=43 // pred_region
        %vm664 = vcmask 0
        %665 = vst.msk [vmem:[%s479] sm:$0x1] %vm664, 0.0
        %666 = vst.msk [vmem:[%s482] sm:$0x1] %vm664, 0.0
        %667 = vst.msk [vmem:[%s485] sm:$0x1] %vm664, 0.0
        %668 = vst.msk [vmem:[%s488] sm:$0x1] %vm664, 0.0
      $region48: #{multibox_loss.5} parent=43 // pred_fallthru
        _
      %v669 = vld [vmem:[%s479] sm:$0x1]
      %v670 = vadd.f32 %v669, %v503
      %vm671 = vcmask 0
      %672 = vst.msk [vmem:[%s479] sm:$0x1] %vm671, %v670
      %v673 = vld [vmem:[%s482] sm:$0x1]
      %v674 = vadd.f32 %v673, %v506
      %675 = vst.msk [vmem:[%s482] sm:$0x1] %vm671, %v674
      %v676 = vld [vmem:[%s485] sm:$0x1]
      %v677 = vadd.f32 %v676, %v644
      %678 = vst.msk [vmem:[%s485] sm:$0x1] %vm671, %v677
      %v679 = vld [vmem:[%s488] sm:$0x1]
      %v680 = vadd.f32 %v679, %v659
      %681 = vst.msk [vmem:[%s488] sm:$0x1] %vm671, %v680
      %p682 = scmp.lt.s32.totalorder %s25, 1
      %s683 = scalar_select %p682, %s25, 1
      %s684 = scalar_lea.vmem %s6, %s683
      %p685 = scmp.lt.s32.totalorder %s25, 1
      %s686 = scalar_select %p685, %s25, 1
      %s687 = scalar_lea.vmem %s7, %s686
      %p688 = scmp.lt.s32.totalorder %s25, 1
      %s689 = scalar_select %p688, %s25, 1
      %s690 = scalar_lea.vmem %s8, %s689
      %p691 = scmp.lt.s32.totalorder %s25, 1
      %s692 = scalar_select %p691, %s25, 1
      %s693 = scalar_lea.vmem %s9, %s692
      // Predicated region
      $region49: #{multibox_loss.5} parent=43 // pred_check
        %p694 = pneg %p215
      $region50: #{multibox_loss.5} parent=43 // pred_check_branch
        %696 = sbr.rel (%p694) target = $region52
      $region51: #{multibox_loss.5} parent=43 // pred_region
        _
      $region52: #{multibox_loss.5} parent=43 // pred_fallthru
        _
      // Predicated region
      $region53: #{multibox_loss.5} parent=43 // pred_check
        %p697 = pneg %p241
      $region54: #{multibox_loss.5} parent=43 // pred_check_branch
        %699 = sbr.rel (%p697) target = $region56
      $region55: #{multibox_loss.5} parent=43 // pred_region
        _
      $region56: #{multibox_loss.5} parent=43 // pred_fallthru
        _
      // Predicated region
      $region57: #{multibox_loss.5} parent=43 // pred_check
        %p700 = pneg %p267
      $region58: #{multibox_loss.5} parent=43 // pred_check_branch
        %702 = sbr.rel (%p700) target = $region60
      $region59: #{multibox_loss.5} parent=43 // pred_region
        _
      $region60: #{multibox_loss.5} parent=43 // pred_fallthru
        _
      // Predicated region
      $region61: #{multibox_loss.5} parent=43 // pred_check
        %p703 = pneg %p293
      $region62: #{multibox_loss.5} parent=43 // pred_check_branch
        %705 = sbr.rel (%p703) target = $region64
      $region63: #{multibox_loss.5} parent=43 // pred_region
        _
      $region64: #{multibox_loss.5} parent=43 // pred_fallthru
        _
    $region44: #{multibox_loss.5} parent=5 // pred_fallthru
      _
    %p706 = scmp.le.s32.totalorder 2, %s16
    // Predicated region
    $region65: #{multibox_loss.5} parent=5 // pred_check
      %p707 = pneg %p706
    $region66: #{multibox_loss.5} parent=5 // pred_check_branch
      %709 = sbr.rel (%p707) target = $region68
    $region67: #{multibox_loss.5} parent=5 // pred_region
      %s710 = ssub.s32 %s16, 2
      // Predicated region
      $region69: #{multibox_loss.5} parent=67 // pred_check
        %p711 = pneg %p221
      $region70: #{multibox_loss.5} parent=67 // pred_check_branch
        %713 = sbr.rel (%p711) target = $region72
      $region71: #{multibox_loss.5} parent=67 // pred_region
        %p714 = scmp.lt.s32.totalorder %s27, 1
        %s715 = scalar_select %p714, %s27, 1
        %s716 = scalar_lea.vmem %s6, %s715
      $region72: #{multibox_loss.5} parent=67 // pred_fallthru
        _
      // Predicated region
      $region73: #{multibox_loss.5} parent=67 // pred_check
        %p717 = pneg %p247
      $region74: #{multibox_loss.5} parent=67 // pred_check_branch
        %719 = sbr.rel (%p717) target = $region76
      $region75: #{multibox_loss.5} parent=67 // pred_region
        %p720 = scmp.lt.s32.totalorder %s27, 1
        %s721 = scalar_select %p720, %s27, 1
        %s722 = scalar_lea.vmem %s7, %s721
      $region76: #{multibox_loss.5} parent=67 // pred_fallthru
        _
      // Predicated region
      $region77: #{multibox_loss.5} parent=67 // pred_check
        %p723 = pneg %p273
      $region78: #{multibox_loss.5} parent=67 // pred_check_branch
        %725 = sbr.rel (%p723) target = $region80
      $region79: #{multibox_loss.5} parent=67 // pred_region
        %p726 = scmp.lt.s32.totalorder %s27, 1
        %s727 = scalar_select %p726, %s27, 1
        %s728 = scalar_lea.vmem %s8, %s727
      $region80: #{multibox_loss.5} parent=67 // pred_fallthru
        _
      // Predicated region
      $region81: #{multibox_loss.5} parent=67 // pred_check
        %p729 = pneg %p299
      $region82: #{multibox_loss.5} parent=67 // pred_check_branch
        %731 = sbr.rel (%p729) target = $region84
      $region83: #{multibox_loss.5} parent=67 // pred_region
        %p732 = scmp.lt.s32.totalorder %s27, 1
        %s733 = scalar_select %p732, %s27, 1
        %s734 = scalar_lea.vmem %s9, %s733
      $region84: #{multibox_loss.5} parent=67 // pred_fallthru
        _
    $region68: #{multibox_loss.5} parent=5 // pred_fallthru
      _
  $region6: #{multibox_loss.5} parent=0 // loop_footer
    %s20 = sadd.s32 1, %s16
  $region7: #{multibox_loss.5} parent=0 // loop_footer_branch
    %15 = sbr.rel target = $region3
  $region8: #{multibox_loss.5} parent=0 // loop_exit
    _

</llo_original>
